<compile_context>
chip_gen: v6e
topology: v6e:2x2x1
jax: 0.10.0
libtpu: 0.0.40
codegen_flags: <defaults>
</compile_context>

<pallas_src>
import functools

import numpy as np

import jax
import jax.numpy as jnp
from jax.experimental import pallas as pl
from jax.experimental.pallas import tpu as pltpu


# ------------------------------ Pallas kernel ------------------------------ #

def _lenet5_kernel(x_ref, w1_ref, b1_ref, w2_ref, b2_ref,
                   wfc1_ref, bfc1_ref, wfc2_ref, bfc2_ref, wfc3_ref, bfc3_ref,
                   o_ref):
    f32, bf16 = jnp.float32, jnp.bfloat16
    TB = x_ref.shape[0] // 28           # images per grid step (multiple of 8)
    L1 = w1_ref.shape[1]                # 2 * 14 * C1
    L2 = w2_ref.shape[1]                # 2 * 5  * C2
    half1 = L1 // 2                     # 14 * C1
    half2 = L2 // 2                     # 5 * C2

    # conv1: single merged-K Toeplitz GEMM + bias + ReLU (f32 epilogue).
    # Rows: parity-major / height-major / batch-minor (wrapper ordering).
    # Lanes: [even-ow | odd-ow] x C1.
    y = jnp.dot(x_ref[...], w1_ref[...], preferred_element_type=f32)
    y = jnp.maximum(y + b1_ref[...], 0.0)                    # (28*TB, L1)

    # Fused 2x2 maxpool #1, entirely in f32:
    #   rows  -> contiguous half split (even vs odd conv rows),
    #   cols  -> contiguous lane-half split (even vs odd conv cols).
    pr1 = jnp.maximum(y[:14 * TB, :], y[14 * TB:, :])        # (14*TB, L1)
    a1 = jnp.maximum(pr1[:, :half1], pr1[:, half1:])         # (14*TB, 14*C1)
    # a1 row = oh1*TB + b, lane = ow1*C1 + c   (NHWC slab, batch-minor rows)

    # conv2: build the merged-K LHS from 5 contiguous row-shifted slices
    # (lane concat), then one GEMM + bias + ReLU.
    lhs2 = jnp.concatenate(
        [a1[ki * TB:(ki + 10) * TB, :] for ki in range(5)], axis=1)
    z = jnp.dot(lhs2.astype(bf16), w2_ref[...], preferred_element_type=f32)
    z = jnp.maximum(z + b2_ref[...], 0.0)                    # (10*TB, L2)
    # z row = oh2*TB + b, lanes = [even-ow2 | odd-ow2] x C2

    # Fused 2x2 maxpool #2 + NHWC->PyTorch flatten: directly assemble the fc1
    # LHS (TB, 25*C2).  Row pooling pairs adjacent TB-row blocks; column
    # pooling is the lane-half max; flatten is a lane concat over oh3.
    chunks = []
    for r in range(5):
        zr = jnp.maximum(z[(2 * r) * TB:(2 * r + 1) * TB, :],
                         z[(2 * r + 1) * TB:(2 * r + 2) * TB, :])   # (TB, L2)
        chunks.append(jnp.maximum(zr[:, :half2], zr[:, half2:]))    # (TB, 5*C2)
    lhs_fc1 = jnp.concatenate(chunks, axis=1).astype(bf16)          # (TB, 25*C2)

    # fc1 / fc2 / fc3 as single batched GEMMs (bias/ReLU in f32).
    h1 = jnp.maximum(
        jnp.dot(lhs_fc1, wfc1_ref[...], preferred_element_type=f32)
        + bfc1_ref[...], 0.0).astype(bf16)
    h2 = jnp.maximum(
        jnp.dot(h1, wfc2_ref[...], preferred_element_type=f32)
        + bfc2_ref[...], 0.0).astype(bf16)
    # fc3 output padded to 128 lanes -> unmasked, lane-dense (TB, 128) store.
    o_ref[...] = (jnp.dot(h2, wfc3_ref[...], preferred_element_type=f32)
                  + bfc3_ref[...]).astype(o_ref.dtype)


# ------------------------------- wrapper ----------------------------------- #

def _round_up(n, m):
    return ((n + m - 1) // m) * m


def _resident_spec(a):
    """Full-array block with a constant index map -> weight stays in VMEM."""
    return pl.BlockSpec(a.shape, lambda n, _nd=a.ndim: (0,) * _nd)


def lenet5_forward(x, kp, num_class=10, tb=32):
    """x: (B, 1, 28, 28) float32 NCHW -> (B, num_class) float32 logits."""
    B = x.shape[0]
    # Batch tile: multiple of 8 sublanes; don't over-pad tiny batches.
    TB = _round_up(min(tb, _round_up(B, 8)), 8)
    nb = pl.cdiv(B, TB)
    Bp = nb * TB

    # --- conv1 row-im2col in bf16 (pure data-movement glue, ~9 KB/image) --- #
    xi = x[:, 0, :, :].astype(jnp.bfloat16)
    xpad = jnp.pad(xi, ((0, Bp - B), (2, 2), (2, 2)))                 # (Bp,32,32)
    win = jnp.stack([xpad[:, ki:ki + 28, :] for ki in range(5)], axis=2)
    xcol = win.reshape(Bp, 28, 5 * 32)                                # lane=ki*32+col
    # Per-block row order: parity-major, height-major, batch-minor, so the
    # kernel's pooling / conv2 row shifts are contiguous slices.
    xcol = xcol.reshape(nb, TB, 14, 2, 160).transpose(0, 3, 2, 1, 4)
    xcol = xcol.reshape(nb * 28 * TB, 160)

    weights = (kp["w1"], kp["b1"], kp["w2"], kp["b2"], kp["wfc1"], kp["bfc1"],
               kp["wfc2"], kp["bfc2"], kp["wfc3"], kp["bfc3"])
    L1, L2 = kp["w1"].shape[1], kp["w2"].shape[1]
    flops = 2 * Bp * (28 * 160 * L1 + 10 * kp["w2"].shape[0] * L2
                      + kp["wfc1"].shape[0] * 120 + 120 * 84 + 84 * 128)
    bytes_accessed = int(xcol.size) * 2 + Bp * 128 * 4 + sum(
        int(w.size) * w.dtype.itemsize for w in weights)

    out = pl.pallas_call(
        _lenet5_kernel,
        out_shape=jax.ShapeDtypeStruct((Bp, 128), jnp.float32),
        grid=(nb,),
        in_specs=[pl.BlockSpec((28 * TB, 160), lambda n: (n, 0))]
                 + [_resident_spec(w) for w in weights],
        out_specs=pl.BlockSpec((TB, 128), lambda n: (n, 0)),
        compiler_params=pltpu.CompilerParams(
            dimension_semantics=("parallel",)),
        cost_estimate=pl.CostEstimate(flops=flops, transcendentals=0,
                                      bytes_accessed=bytes_accessed),
    )(xcol, *weights)
    return out[:B, :num_class]


# ----------------------- parameters (PyTorch layout) ------------------------ #

def init_torch_params(key, num_class=10, num_ch1=6, num_ch2=16):
    """Parameters in PyTorch layouts, PyTorch-style uniform init."""
    ks = jax.random.split(key, 10)

    def u(k, shape, fan_in):
        bound = 1.0 / float(np.sqrt(fan_in))
        return jax.random.uniform(k, shape, jnp.float32, -bound, bound)

    return dict(
        conv1_w=u(ks[0], (num_ch1, 1, 5, 5), 25),
        conv1_b=u(ks[1], (num_ch1,), 25),
        conv2_w=u(ks[2], (num_ch2, num_ch1, 5, 5), num_ch1 * 25),
        conv2_b=u(ks[3], (num_ch2,), num_ch1 * 25),
        fc1_w=u(ks[4], (120, num_ch2 * 25), num_ch2 * 25),
        fc1_b=u(ks[5], (120,), num_ch2 * 25),
        fc2_w=u(ks[6], (84, 120), 120),
        fc2_b=u(ks[7], (84,), 120),
        fc3_w=u(ks[8], (num_class, 84), 84),
        fc3_b=u(ks[9], (num_class,), 84),
    )


def prepare_kernel_params(tp):
    """One-time host-side repack of PyTorch-layout params into kernel layout."""
    p = {k: np.asarray(v, np.float32) for k, v in tp.items()}
    C1 = p["conv1_w"].shape[0]
    C2 = p["conv2_w"].shape[0]
    num_class = p["fc3_w"].shape[0]
    assert num_class <= 128

    # conv1 -> merged-K Toeplitz (5*32, 2*14*C1); out lanes [even-ow|odd-ow] x C1.
    L1 = 2 * 14 * C1
    W1 = np.zeros((5, 32, L1), np.float32)
    b1 = np.zeros((1, L1), np.float32)
    for q in range(2):
        for owh in range(14):
            ow = 2 * owh + q
            for co in range(C1):
                l = (q * 14 + owh) * C1 + co
                b1[0, l] = p["conv1_b"][co]
                for ki in range(5):
                    for kj in range(5):
                        W1[ki, ow + kj, l] = p["conv1_w"][co, 0, ki, kj]
    W1 = W1.reshape(5 * 32, L1)

    # conv2 -> merged-K Toeplitz (5*14*C1, 2*5*C2) over the NHWC pool1 slab.
    L2 = 2 * 5 * C2
    W2 = np.zeros((5, 14 * C1, L2), np.float32)
    b2 = np.zeros((1, L2), np.float32)
    for q in range(2):
        for owh in range(5):
            ow2 = 2 * owh + q
            for co in range(C2):
                l = (q * 5 + owh) * C2 + co
                b2[0, l] = p["conv2_b"][co]
                for ki in range(5):
                    for kj in range(5):
                        for ci in range(C1):
                            W2[ki, (ow2 + kj) * C1 + ci, l] = p["conv2_w"][co, ci, ki, kj]
    W2 = W2.reshape(5 * 14 * C1, L2)

    # fc1 (120, C2*25), PyTorch NCHW flatten -> (25*C2, 120) in kernel NHWC order.
    Wfc1 = np.zeros((5, 5 * C2, 120), np.float32)
    for oh in range(5):
        for ow in range(5):
            for co in range(C2):
                Wfc1[oh, ow * C2 + co, :] = p["fc1_w"][:, co * 25 + oh * 5 + ow]
    Wfc1 = Wfc1.reshape(25 * C2, 120)

    # fc3 padded to 128 output lanes -> lane-dense final store.
    Wfc3 = np.zeros((84, 128), np.float32)
    Wfc3[:, :num_class] = p["fc3_w"].T
    bfc3 = np.zeros((1, 128), np.float32)
    bfc3[0, :num_class] = p["fc3_b"]

    bf16 = jnp.bfloat16
    return dict(
        w1=jnp.asarray(W1, bf16), b1=jnp.asarray(b1),
        w2=jnp.asarray(W2, bf16), b2=jnp.asarray(b2),
        wfc1=jnp.asarray(Wfc1, bf16), bfc1=jnp.asarray(p["fc1_b"][None, :]),
        wfc2=jnp.asarray(p["fc2_w"].T, bf16), bfc2=jnp.asarray(p["fc2_b"][None, :]),
        wfc3=jnp.asarray(Wfc3, bf16), bfc3=jnp.asarray(bfc3),
    )


# ----------------------------- f32 reference -------------------------------- #

def lenet5_reference(x, tp):
    """Pure-JAX reference mirroring the PyTorch module (f32)."""
    dn = ("NCHW", "OIHW", "NCHW")
    y = jax.lax.conv_general_dilated(x, tp["conv1_w"], (1, 1), ((2, 2), (2, 2)),
                                     dimension_numbers=dn)
    y = jax.nn.relu(y + tp["conv1_b"][None, :, None, None])
    y = jax.lax.reduce_window(y, -jnp.inf, jax.lax.max,
                              (1, 1, 2, 2), (1, 1, 2, 2), "VALID")
    y = jax.lax.conv_general_dilated(y, tp["conv2_w"], (1, 1), "VALID",
                                     dimension_numbers=dn)
    y = jax.nn.relu(y + tp["conv2_b"][None, :, None, None])
    y = jax.lax.reduce_window(y, -jnp.inf, jax.lax.max,
                              (1, 1, 2, 2), (1, 1, 2, 2), "VALID")
    y = y.reshape(y.shape[0], -1)                       # NCHW channel-major flatten
    y = jax.nn.relu(y @ tp["fc1_w"].T + tp["fc1_b"])
    y = jax.nn.relu(y @ tp["fc2_w"].T + tp["fc2_b"])
    return y @ tp["fc3_w"].T + tp["fc3_b"]


# --------------------------------- main ------------------------------------- #

if __name__ == "__main__":
    key = jax.random.PRNGKey(0)
    kx, kx2, kw = jax.random.split(key, 3)
    # LeNet5 geometry requires 28x28 single-channel input (fc1 expects C2*5*5).
    x = jax.random.normal(kx, (2, 1, 28, 28), jnp.float32)

    torch_params = init_torch_params(kw, num_class=10)
    kparams = prepare_kernel_params(torch_params)

    fwd = jax.jit(functools.partial(lenet5_forward, num_class=10))
    out = fwd(x, kparams)
    jax.block_until_ready(out)
    assert out.shape == (2, 10) and out.dtype == jnp.float32

    # Sanity check vs a plain-JAX f32 reference (bf16 MXU operands, f32 accum).
    ref = lenet5_reference(x, torch_params)
    err = float(jnp.max(jnp.abs(out - ref)))
    assert np.isfinite(err) and err < 1e-1, f"max |diff| vs reference = {err}"

    # Exercise a multi-step grid (batch padding + batch tiling path): B=18, TB=8.
    x2 = jax.random.normal(kx2, (18, 1, 28, 28), jnp.float32)
    fwd2 = jax.jit(functools.partial(lenet5_forward, num_class=10, tb=8))
    out2 = fwd2(x2, kparams)
    jax.block_until_ready(out2)
    ref2 = lenet5_reference(x2, torch_params)
    err2 = float(jnp.max(jnp.abs(out2 - ref2)))
    assert out2.shape == (18, 10) and np.isfinite(err2) and err2 < 1e-1, \
        f"max |diff| vs reference (batched) = {err2}"

    print("KERNEL_OK")
</pallas_src>

<mosaic_0001>
module attributes {stable_mosaic.version = 11 : i64} {
  func.func @_lenet5_kernel(%arg0: i32, %arg1: memref<224x160xbf16, #tpu.memory_space<vmem>>, %arg2: memref<160x168xbf16, #tpu.memory_space<vmem>>, %arg3: memref<1x168xf32, #tpu.memory_space<vmem>>, %arg4: memref<420x160xbf16, #tpu.memory_space<vmem>>, %arg5: memref<1x160xf32, #tpu.memory_space<vmem>>, %arg6: memref<400x120xbf16, #tpu.memory_space<vmem>>, %arg7: memref<1x120xf32, #tpu.memory_space<vmem>>, %arg8: memref<120x84xbf16, #tpu.memory_space<vmem>>, %arg9: memref<1x84xf32, #tpu.memory_space<vmem>>, %arg10: memref<84x128xbf16, #tpu.memory_space<vmem>>, %arg11: memref<1x128xf32, #tpu.memory_space<vmem>>, %arg12: memref<8x128xf32, #tpu.memory_space<vmem>>) attributes {dimension_semantics = [#tpu.dimension_semantics<parallel>], iteration_bounds = array<i64: 1>, scalar_prefetch = 0 : i64, scratch_operands = 0 : i64, tpu.core_type = #tpu.core_type<tc>, window_params = [{transform_indices = @transform_0, window_bounds = array<i64: 224, 160>}, {pipeline_mode = #tpu.pipeline_mode<synchronous>, transform_indices = @transform_1, window_bounds = array<i64: 160, 168>}, {pipeline_mode = #tpu.pipeline_mode<synchronous>, transform_indices = @transform_2, window_bounds = array<i64: 1, 168>}, {pipeline_mode = #tpu.pipeline_mode<synchronous>, transform_indices = @transform_3, window_bounds = array<i64: 420, 160>}, {pipeline_mode = #tpu.pipeline_mode<synchronous>, transform_indices = @transform_4, window_bounds = array<i64: 1, 160>}, {pipeline_mode = #tpu.pipeline_mode<synchronous>, transform_indices = @transform_5, window_bounds = array<i64: 400, 120>}, {pipeline_mode = #tpu.pipeline_mode<synchronous>, transform_indices = @transform_6, window_bounds = array<i64: 1, 120>}, {pipeline_mode = #tpu.pipeline_mode<synchronous>, transform_indices = @transform_7, window_bounds = array<i64: 120, 84>}, {pipeline_mode = #tpu.pipeline_mode<synchronous>, transform_indices = @transform_8, window_bounds = array<i64: 1, 84>}, {pipeline_mode = #tpu.pipeline_mode<synchronous>, transform_indices = @transform_9, window_bounds = array<i64: 84, 128>}, {pipeline_mode = #tpu.pipeline_mode<synchronous>, transform_indices = @transform_10, window_bounds = array<i64: 1, 128>}, {transform_indices = @transform_11, window_bounds = array<i64: 8, 128>}]} {
    %c0 = arith.constant 0 : index
    %c0_0 = arith.constant 0 : index
    %0 = vector.load %arg1[%c0, %c0_0] : memref<224x160xbf16, #tpu.memory_space<vmem>>, vector<224x160xbf16>
    %c0_1 = arith.constant 0 : index
    %c0_2 = arith.constant 0 : index
    %1 = vector.load %arg2[%c0_1, %c0_2] : memref<160x168xbf16, #tpu.memory_space<vmem>>, vector<160x168xbf16>
    %cst = arith.constant dense<0.000000e+00> : vector<224x168xf32>
    %2 = tpu.matmul %0, %1, %cst {dimension_numbers = #tpu.dot_dimension_numbers<[1], [0], [0], [1], [0, 0, 1, 1], [], []>} : vector<224x160xbf16>, vector<160x168xbf16>, vector<224x168xf32> -> vector<224x168xf32>
    %c0_3 = arith.constant 0 : index
    %c0_4 = arith.constant 0 : index
    %3 = vector.load %arg3[%c0_3, %c0_4] : memref<1x168xf32, #tpu.memory_space<vmem>>, vector<1x168xf32>
    %4 = vector.broadcast %3 : vector<1x168xf32> to vector<224x168xf32>
    %5 = arith.addf %2, %4 : vector<224x168xf32>
    %cst_5 = arith.constant 0.000000e+00 : f32
    %6 = vector.broadcast %cst_5 : f32 to vector<224x168xf32>
    %7 = arith.maximumf %5, %6 : vector<224x168xf32>
    %8 = vector.extract_strided_slice %7 {offsets = [0, 0], sizes = [112, 168], strides = [1, 1]} : vector<224x168xf32> to vector<112x168xf32>
    %9 = vector.extract_strided_slice %7 {offsets = [112, 0], sizes = [112, 168], strides = [1, 1]} : vector<224x168xf32> to vector<112x168xf32>
    %10 = arith.maximumf %8, %9 : vector<112x168xf32>
    %11 = vector.extract_strided_slice %10 {offsets = [0, 0], sizes = [112, 84], strides = [1, 1]} : vector<112x168xf32> to vector<112x84xf32>
    %12 = vector.extract_strided_slice %10 {offsets = [0, 84], sizes = [112, 84], strides = [1, 1]} : vector<112x168xf32> to vector<112x84xf32>
    %13 = arith.maximumf %11, %12 : vector<112x84xf32>
    %14 = vector.extract_strided_slice %13 {offsets = [0, 0], sizes = [80, 84], strides = [1, 1]} : vector<112x84xf32> to vector<80x84xf32>
    %15 = vector.extract_strided_slice %13 {offsets = [8, 0], sizes = [80, 84], strides = [1, 1]} : vector<112x84xf32> to vector<80x84xf32>
    %16 = vector.extract_strided_slice %13 {offsets = [16, 0], sizes = [80, 84], strides = [1, 1]} : vector<112x84xf32> to vector<80x84xf32>
    %17 = vector.extract_strided_slice %13 {offsets = [24, 0], sizes = [80, 84], strides = [1, 1]} : vector<112x84xf32> to vector<80x84xf32>
    %18 = vector.extract_strided_slice %13 {offsets = [32, 0], sizes = [80, 84], strides = [1, 1]} : vector<112x84xf32> to vector<80x84xf32>
    %19 = tpu.concatenate %14, %15, %16, %17, %18 in 1 : vector<80x84xf32>, vector<80x84xf32>, vector<80x84xf32>, vector<80x84xf32>, vector<80x84xf32> -> vector<80x420xf32>
    %20 = arith.truncf %19 : vector<80x420xf32> to vector<80x420xbf16>
    %c0_6 = arith.constant 0 : index
    %c0_7 = arith.constant 0 : index
    %21 = vector.load %arg4[%c0_6, %c0_7] : memref<420x160xbf16, #tpu.memory_space<vmem>>, vector<420x160xbf16>
    %cst_8 = arith.constant dense<0.000000e+00> : vector<80x160xf32>
    %22 = tpu.matmul %20, %21, %cst_8 {dimension_numbers = #tpu.dot_dimension_numbers<[1], [0], [0], [1], [0, 0, 1, 1], [], []>} : vector<80x420xbf16>, vector<420x160xbf16>, vector<80x160xf32> -> vector<80x160xf32>
    %c0_9 = arith.constant 0 : index
    %c0_10 = arith.constant 0 : index
    %23 = vector.load %arg5[%c0_9, %c0_10] : memref<1x160xf32, #tpu.memory_space<vmem>>, vector<1x160xf32>
    %24 = vector.broadcast %23 : vector<1x160xf32> to vector<80x160xf32>
    %25 = arith.addf %22, %24 : vector<80x160xf32>
    %cst_11 = arith.constant 0.000000e+00 : f32
    %26 = vector.broadcast %cst_11 : f32 to vector<80x160xf32>
    %27 = arith.maximumf %25, %26 : vector<80x160xf32>
    %28 = vector.extract_strided_slice %27 {offsets = [0, 0], sizes = [8, 160], strides = [1, 1]} : vector<80x160xf32> to vector<8x160xf32>
    %29 = vector.extract_strided_slice %27 {offsets = [8, 0], sizes = [8, 160], strides = [1, 1]} : vector<80x160xf32> to vector<8x160xf32>
    %30 = arith.maximumf %28, %29 : vector<8x160xf32>
    %31 = vector.extract_strided_slice %30 {offsets = [0, 0], sizes = [8, 80], strides = [1, 1]} : vector<8x160xf32> to vector<8x80xf32>
    %32 = vector.extract_strided_slice %30 {offsets = [0, 80], sizes = [8, 80], strides = [1, 1]} : vector<8x160xf32> to vector<8x80xf32>
    %33 = arith.maximumf %31, %32 : vector<8x80xf32>
    %34 = vector.extract_strided_slice %27 {offsets = [16, 0], sizes = [8, 160], strides = [1, 1]} : vector<80x160xf32> to vector<8x160xf32>
    %35 = vector.extract_strided_slice %27 {offsets = [24, 0], sizes = [8, 160], strides = [1, 1]} : vector<80x160xf32> to vector<8x160xf32>
    %36 = arith.maximumf %34, %35 : vector<8x160xf32>
    %37 = vector.extract_strided_slice %36 {offsets = [0, 0], sizes = [8, 80], strides = [1, 1]} : vector<8x160xf32> to vector<8x80xf32>
    %38 = vector.extract_strided_slice %36 {offsets = [0, 80], sizes = [8, 80], strides = [1, 1]} : vector<8x160xf32> to vector<8x80xf32>
    %39 = arith.maximumf %37, %38 : vector<8x80xf32>
    %40 = vector.extract_strided_slice %27 {offsets = [32, 0], sizes = [8, 160], strides = [1, 1]} : vector<80x160xf32> to vector<8x160xf32>
    %41 = vector.extract_strided_slice %27 {offsets = [40, 0], sizes = [8, 160], strides = [1, 1]} : vector<80x160xf32> to vector<8x160xf32>
    %42 = arith.maximumf %40, %41 : vector<8x160xf32>
    %43 = vector.extract_strided_slice %42 {offsets = [0, 0], sizes = [8, 80], strides = [1, 1]} : vector<8x160xf32> to vector<8x80xf32>
    %44 = vector.extract_strided_slice %42 {offsets = [0, 80], sizes = [8, 80], strides = [1, 1]} : vector<8x160xf32> to vector<8x80xf32>
    %45 = arith.maximumf %43, %44 : vector<8x80xf32>
    %46 = vector.extract_strided_slice %27 {offsets = [48, 0], sizes = [8, 160], strides = [1, 1]} : vector<80x160xf32> to vector<8x160xf32>
    %47 = vector.extract_strided_slice %27 {offsets = [56, 0], sizes = [8, 160], strides = [1, 1]} : vector<80x160xf32> to vector<8x160xf32>
    %48 = arith.maximumf %46, %47 : vector<8x160xf32>
    %49 = vector.extract_strided_slice %48 {offsets = [0, 0], sizes = [8, 80], strides = [1, 1]} : vector<8x160xf32> to vector<8x80xf32>
    %50 = vector.extract_strided_slice %48 {offsets = [0, 80], sizes = [8, 80], strides = [1, 1]} : vector<8x160xf32> to vector<8x80xf32>
    %51 = arith.maximumf %49, %50 : vector<8x80xf32>
    %52 = vector.extract_strided_slice %27 {offsets = [64, 0], sizes = [8, 160], strides = [1, 1]} : vector<80x160xf32> to vector<8x160xf32>
    %53 = vector.extract_strided_slice %27 {offsets = [72, 0], sizes = [8, 160], strides = [1, 1]} : vector<80x160xf32> to vector<8x160xf32>
    %54 = arith.maximumf %52, %53 : vector<8x160xf32>
    %55 = vector.extract_strided_slice %54 {offsets = [0, 0], sizes = [8, 80], strides = [1, 1]} : vector<8x160xf32> to vector<8x80xf32>
    %56 = vector.extract_strided_slice %54 {offsets = [0, 80], sizes = [8, 80], strides = [1, 1]} : vector<8x160xf32> to vector<8x80xf32>
    %57 = arith.maximumf %55, %56 : vector<8x80xf32>
    %58 = tpu.concatenate %33, %39, %45, %51, %57 in 1 : vector<8x80xf32>, vector<8x80xf32>, vector<8x80xf32>, vector<8x80xf32>, vector<8x80xf32> -> vector<8x400xf32>
    %59 = arith.truncf %58 : vector<8x400xf32> to vector<8x400xbf16>
    %c0_12 = arith.constant 0 : index
    %c0_13 = arith.constant 0 : index
    %60 = vector.load %arg6[%c0_12, %c0_13] : memref<400x120xbf16, #tpu.memory_space<vmem>>, vector<400x120xbf16>
    %cst_14 = arith.constant dense<0.000000e+00> : vector<8x120xf32>
    %61 = tpu.matmul %59, %60, %cst_14 {dimension_numbers = #tpu.dot_dimension_numbers<[1], [0], [0], [1], [0, 0, 1, 1], [], []>} : vector<8x400xbf16>, vector<400x120xbf16>, vector<8x120xf32> -> vector<8x120xf32>
    %c0_15 = arith.constant 0 : index
    %c0_16 = arith.constant 0 : index
    %62 = vector.load %arg7[%c0_15, %c0_16] : memref<1x120xf32, #tpu.memory_space<vmem>>, vector<1x120xf32>
    %63 = vector.broadcast %62 : vector<1x120xf32> to vector<8x120xf32>
    %64 = arith.addf %61, %63 : vector<8x120xf32>
    %cst_17 = arith.constant 0.000000e+00 : f32
    %65 = vector.broadcast %cst_17 : f32 to vector<8x120xf32>
    %66 = arith.maximumf %64, %65 : vector<8x120xf32>
    %67 = arith.truncf %66 : vector<8x120xf32> to vector<8x120xbf16>
    %c0_18 = arith.constant 0 : index
    %c0_19 = arith.constant 0 : index
    %68 = vector.load %arg8[%c0_18, %c0_19] : memref<120x84xbf16, #tpu.memory_space<vmem>>, vector<120x84xbf16>
    %cst_20 = arith.constant dense<0.000000e+00> : vector<8x84xf32>
    %69 = tpu.matmul %67, %68, %cst_20 {dimension_numbers = #tpu.dot_dimension_numbers<[1], [0], [0], [1], [0, 0, 1, 1], [], []>} : vector<8x120xbf16>, vector<120x84xbf16>, vector<8x84xf32> -> vector<8x84xf32>
    %c0_21 = arith.constant 0 : index
    %c0_22 = arith.constant 0 : index
    %70 = vector.load %arg9[%c0_21, %c0_22] : memref<1x84xf32, #tpu.memory_space<vmem>>, vector<1x84xf32>
    %71 = vector.broadcast %70 : vector<1x84xf32> to vector<8x84xf32>
    %72 = arith.addf %69, %71 : vector<8x84xf32>
    %cst_23 = arith.constant 0.000000e+00 : f32
    %73 = vector.broadcast %cst_23 : f32 to vector<8x84xf32>
    %74 = arith.maximumf %72, %73 : vector<8x84xf32>
    %75 = arith.truncf %74 : vector<8x84xf32> to vector<8x84xbf16>
    %c0_24 = arith.constant 0 : index
    %c0_25 = arith.constant 0 : index
    %76 = vector.load %arg10[%c0_24, %c0_25] : memref<84x128xbf16, #tpu.memory_space<vmem>>, vector<84x128xbf16>
    %cst_26 = arith.constant dense<0.000000e+00> : vector<8x128xf32>
    %77 = tpu.matmul %75, %76, %cst_26 {dimension_numbers = #tpu.dot_dimension_numbers<[1], [0], [0], [1], [0, 0, 1, 1], [], []>} : vector<8x84xbf16>, vector<84x128xbf16>, vector<8x128xf32> -> vector<8x128xf32>
    %c0_27 = arith.constant 0 : index
    %c0_28 = arith.constant 0 : index
    %78 = vector.load %arg11[%c0_27, %c0_28] : memref<1x128xf32, #tpu.memory_space<vmem>>, vector<1x128xf32>
    %79 = vector.broadcast %78 : vector<1x128xf32> to vector<8x128xf32>
    %80 = arith.addf %77, %79 : vector<8x128xf32>
    %c0_29 = arith.constant 0 : index
    %c0_30 = arith.constant 0 : index
    %81 = vector.load %arg12[%c0_29, %c0_30] : memref<8x128xf32, #tpu.memory_space<vmem>>, vector<8x128xf32>
    tpu.vector_store %arg12[%c0_29, %c0_30], %80 {strides = array<i32>} : memref<8x128xf32, #tpu.memory_space<vmem>>, vector<8x128xf32>,
    return
  }
  func.func @transform_0(%arg0: i32) -> (i32, i32) {
    %c0_i32 = arith.constant 0 : i32
    %c0_i32_0 = arith.constant 0 : i32
    return %arg0, %c0_i32 : i32, i32
  }
  func.func @transform_1(%arg0: i32) -> (i32, i32) {
    %c0_i32 = arith.constant 0 : i32
    %c0_i32_0 = arith.constant 0 : i32
    %c0_i32_1 = arith.constant 0 : i32
    return %c0_i32, %c0_i32_0 : i32, i32
  }
  func.func @transform_2(%arg0: i32) -> (i32, i32) {
    %c0_i32 = arith.constant 0 : i32
    %c0_i32_0 = arith.constant 0 : i32
    %c0_i32_1 = arith.constant 0 : i32
    return %c0_i32, %c0_i32_0 : i32, i32
  }
  func.func @transform_3(%arg0: i32) -> (i32, i32) {
    %c0_i32 = arith.constant 0 : i32
    %c0_i32_0 = arith.constant 0 : i32
    %c0_i32_1 = arith.constant 0 : i32
    return %c0_i32, %c0_i32_0 : i32, i32
  }
  func.func @transform_4(%arg0: i32) -> (i32, i32) {
    %c0_i32 = arith.constant 0 : i32
    %c0_i32_0 = arith.constant 0 : i32
    %c0_i32_1 = arith.constant 0 : i32
    return %c0_i32, %c0_i32_0 : i32, i32
  }
  func.func @transform_5(%arg0: i32) -> (i32, i32) {
    %c0_i32 = arith.constant 0 : i32
    %c0_i32_0 = arith.constant 0 : i32
    %c0_i32_1 = arith.constant 0 : i32
    return %c0_i32, %c0_i32_0 : i32, i32
  }
  func.func @transform_6(%arg0: i32) -> (i32, i32) {
    %c0_i32 = arith.constant 0 : i32
    %c0_i32_0 = arith.constant 0 : i32
    %c0_i32_1 = arith.constant 0 : i32
    return %c0_i32, %c0_i32_0 : i32, i32
  }
  func.func @transform_7(%arg0: i32) -> (i32, i32) {
    %c0_i32 = arith.constant 0 : i32
    %c0_i32_0 = arith.constant 0 : i32
    %c0_i32_1 = arith.constant 0 : i32
    return %c0_i32, %c0_i32_0 : i32, i32
  }
  func.func @transform_8(%arg0: i32) -> (i32, i32) {
    %c0_i32 = arith.constant 0 : i32
    %c0_i32_0 = arith.constant 0 : i32
    %c0_i32_1 = arith.constant 0 : i32
    return %c0_i32, %c0_i32_0 : i32, i32
  }
  func.func @transform_9(%arg0: i32) -> (i32, i32) {
    %c0_i32 = arith.constant 0 : i32
    %c0_i32_0 = arith.constant 0 : i32
    %c0_i32_1 = arith.constant 0 : i32
    return %c0_i32, %c0_i32_0 : i32, i32
  }
  func.func @transform_10(%arg0: i32) -> (i32, i32) {
    %c0_i32 = arith.constant 0 : i32
    %c0_i32_0 = arith.constant 0 : i32
    %c0_i32_1 = arith.constant 0 : i32
    return %c0_i32, %c0_i32_0 : i32, i32
  }
  func.func @transform_11(%arg0: i32) -> (i32, i32) {
    %c0_i32 = arith.constant 0 : i32
    %c0_i32_0 = arith.constant 0 : i32
    return %arg0, %c0_i32 : i32, i32
  }
}

</mosaic_0001>

<llo_original>
// kernel: lenet5_forward.1
$region0: #{lenet5_forward.1}
  #allocation0 [shape = 'u32[]', space=smem, size = 0x4, offset = 0x4, fixed_abs, tag = 'smem constant byte address 0x4 - core index']
  #allocation1 [shape = 'u32[144,128]{1,0:T(1,128)}', space=vmem, size = 0x12000, scoped, tag = 'internal scratch']
  %s0 = inlined_call_operand.vmem [shape: bf16[224,160], index: 0, kind: input, shape index: {}]
  %s1 = inlined_call_operand.vmem [shape: bf16[160,168], index: 1, kind: input, shape index: {}]
  %s2 = inlined_call_operand.vmem [shape: f32[1,168], index: 2, kind: input, shape index: {}]
  %s3 = inlined_call_operand.vmem [shape: bf16[420,160], index: 3, kind: input, shape index: {}]
  %s4 = inlined_call_operand.vmem [shape: f32[1,160], index: 4, kind: input, shape index: {}]
  %s5 = inlined_call_operand.vmem [shape: bf16[400,120], index: 5, kind: input, shape index: {}]
  %s6 = inlined_call_operand.vmem [shape: f32[1,120], index: 6, kind: input, shape index: {}]
  %s7 = inlined_call_operand.vmem [shape: bf16[120,84], index: 7, kind: input, shape index: {}]
  %s8 = inlined_call_operand.vmem [shape: f32[1,84], index: 8, kind: input, shape index: {}]
  %s9 = inlined_call_operand.vmem [shape: bf16[84,128], index: 9, kind: input, shape index: {}]
  %s10 = inlined_call_operand.vmem [shape: f32[1,128], index: 10, kind: input, shape index: {}]
  %s11 = inlined_call_operand.vmem [shape: f32[8,128], index: 11, kind: output, shape index: {}]
  %s12 = sld [smem:[#allocation0]]
  $region54: #{lenet5_forward.1} parent=0
    _
  %s14 = ssub.s32 1, %s12
  %s15 = scalar_select 0, %s14, %s12
  // Predicated region
  $region2: #{lenet5_forward.1} parent=0 // pred_check
    _
  $region3: #{lenet5_forward.1} parent=0 // pred_check_branch
    %17 = sbr.rel (0) target = $region5
  $region4: #{lenet5_forward.1} parent=0 // pred_region
    _
  $region5: #{lenet5_forward.1} parent=0 // pred_fallthru
    _
  // Predicated region
  $region6: #{lenet5_forward.1} parent=0 // pred_check
    _
  $region7: #{lenet5_forward.1} parent=0 // pred_check_branch
    %19 = sbr.rel (0) target = $region9
  $region8: #{lenet5_forward.1} parent=0 // pred_region
    _
  $region9: #{lenet5_forward.1} parent=0 // pred_fallthru
    _
  // Predicated region
  $region10: #{lenet5_forward.1} parent=0 // pred_check
    _
  $region11: #{lenet5_forward.1} parent=0 // pred_check_branch
    %21 = sbr.rel (0) target = $region13
  $region12: #{lenet5_forward.1} parent=0 // pred_region
    _
  $region13: #{lenet5_forward.1} parent=0 // pred_fallthru
    _
  // Predicated region
  $region14: #{lenet5_forward.1} parent=0 // pred_check
    _
  $region15: #{lenet5_forward.1} parent=0 // pred_check_branch
    %23 = sbr.rel (0) target = $region17
  $region16: #{lenet5_forward.1} parent=0 // pred_region
    _
  $region17: #{lenet5_forward.1} parent=0 // pred_fallthru
    _
  // Predicated region
  $region18: #{lenet5_forward.1} parent=0 // pred_check
    _
  $region19: #{lenet5_forward.1} parent=0 // pred_check_branch
    %25 = sbr.rel (0) target = $region21
  $region20: #{lenet5_forward.1} parent=0 // pred_region
    _
  $region21: #{lenet5_forward.1} parent=0 // pred_fallthru
    _
  // Predicated region
  $region22: #{lenet5_forward.1} parent=0 // pred_check
    _
  $region23: #{lenet5_forward.1} parent=0 // pred_check_branch
    %27 = sbr.rel (0) target = $region25
  $region24: #{lenet5_forward.1} parent=0 // pred_region
    _
  $region25: #{lenet5_forward.1} parent=0 // pred_fallthru
    _
  // Predicated region
  $region26: #{lenet5_forward.1} parent=0 // pred_check
    _
  $region27: #{lenet5_forward.1} parent=0 // pred_check_branch
    %29 = sbr.rel (0) target = $region29
  $region28: #{lenet5_forward.1} parent=0 // pred_region
    _
  $region29: #{lenet5_forward.1} parent=0 // pred_fallthru
    _
  // Predicated region
  $region30: #{lenet5_forward.1} parent=0 // pred_check
    _
  $region31: #{lenet5_forward.1} parent=0 // pred_check_branch
    %31 = sbr.rel (0) target = $region33
  $region32: #{lenet5_forward.1} parent=0 // pred_region
    _
  $region33: #{lenet5_forward.1} parent=0 // pred_fallthru
    _
  // Predicated region
  $region34: #{lenet5_forward.1} parent=0 // pred_check
    _
  $region35: #{lenet5_forward.1} parent=0 // pred_check_branch
    %33 = sbr.rel (0) target = $region37
  $region36: #{lenet5_forward.1} parent=0 // pred_region
    _
  $region37: #{lenet5_forward.1} parent=0 // pred_fallthru
    _
  // Predicated region
  $region38: #{lenet5_forward.1} parent=0 // pred_check
    _
  $region39: #{lenet5_forward.1} parent=0 // pred_check_branch
    %35 = sbr.rel (0) target = $region41
  $region40: #{lenet5_forward.1} parent=0 // pred_region
    _
  $region41: #{lenet5_forward.1} parent=0 // pred_fallthru
    _
  // Predicated region
  $region42: #{lenet5_forward.1} parent=0 // pred_check
    _
  $region43: #{lenet5_forward.1} parent=0 // pred_check_branch
    %37 = sbr.rel (0) target = $region45
  $region44: #{lenet5_forward.1} parent=0 // pred_region
    _
  $region45: #{lenet5_forward.1} parent=0 // pred_fallthru
    _
  %v39 = vld [vmem:[%s0] sm:$0xff]
  %v40 = vld [vmem:[%s0 + $0x8] sm:$0xff]
  %v41 = vld [vmem:[%s0 + $0x10] sm:$0xff]
  %v42 = vld [vmem:[%s0 + $0x18] sm:$0xff]
  %v43 = vld [vmem:[%s0 + $0x20] sm:$0xff]
  %v44 = vld [vmem:[%s0 + $0x28] sm:$0xff]
  %v45 = vld [vmem:[%s0 + $0x30] sm:$0xff]
  %v46 = vld [vmem:[%s0 + $0x38] sm:$0xff]
  %v47 = vld [vmem:[%s0 + $0x40] sm:$0xff]
  %v48 = vld [vmem:[%s0 + $0x48] sm:$0xff]
  %v49 = vld [vmem:[%s0 + $0x50] sm:$0xff]
  %v50 = vld [vmem:[%s0 + $0x58] sm:$0xff]
  %v51 = vld [vmem:[%s0 + $0x60] sm:$0xff]
  %v52 = vld [vmem:[%s0 + $0x68] sm:$0xff]
  %v53 = vld [vmem:[%s0 + $0x70] sm:$0xff]
  %v54 = vld [vmem:[%s0 + $0x78] sm:$0xff]
  %v55 = vld [vmem:[%s0 + $0x80] sm:$0xff]
  %v56 = vld [vmem:[%s0 + $0x88] sm:$0xff]
  %v57 = vld [vmem:[%s0 + $0x90] sm:$0xff]
  %v58 = vld [vmem:[%s0 + $0x98] sm:$0xff]
  %v59 = vld [vmem:[%s0 + $0xa0] sm:$0xff]
  %v60 = vld [vmem:[%s0 + $0xa8] sm:$0xff]
  %v61 = vld [vmem:[%s0 + $0xb0] sm:$0xff]
  %v62 = vld [vmem:[%s0 + $0xb8] sm:$0xff]
  %v63 = vld [vmem:[%s0 + $0xc0] sm:$0xff]
  %v64 = vld [vmem:[%s0 + $0xc8] sm:$0xff]
  %v65 = vld [vmem:[%s0 + $0xd0] sm:$0xff]
  %v66 = vld [vmem:[%s0 + $0xd8] sm:$0xff]
  %v67 = vld [vmem:[%s1] sm:$0xff]
  %v68 = vld [vmem:[%s1 + $0x8] sm:$0xff]
  %v69 = vld [vmem:[%s1 + $0x10] sm:$0xff]
  %v70 = vld [vmem:[%s1 + $0x18] sm:$0xff]
  %v71 = vld [vmem:[%s1 + $0x20] sm:$0xff]
  %v72 = vld [vmem:[%s1 + $0x28] sm:$0xff]
  %v73 = vld [vmem:[%s1 + $0x30] sm:$0xff]
  %v74 = vld [vmem:[%s1 + $0x38] sm:$0xff]
  %v75 = vld [vmem:[%s1 + $0x40] sm:$0xff]
  %v76 = vld [vmem:[%s1 + $0x48] sm:$0xff]
  %v77 = vld [vmem:[%s1 + $0x50] sm:$0xff]
  %v78 = vld [vmem:[%s1 + $0x58] sm:$0xff]
  %v79 = vld [vmem:[%s1 + $0x60] sm:$0xff]
  %v80 = vld [vmem:[%s1 + $0x68] sm:$0xff]
  %v81 = vld [vmem:[%s1 + $0x70] sm:$0xff]
  %v82 = vld [vmem:[%s1 + $0x78] sm:$0xff]
  %v83 = vld [vmem:[%s1 + $0x80] sm:$0xff]
  %v84 = vld [vmem:[%s1 + $0x88] sm:$0xff]
  %v85 = vld [vmem:[%s1 + $0x90] sm:$0xff]
  %v86 = vld [vmem:[%s1 + $0x98] sm:$0xff]
  %v87 = vld [vmem:[%s2] sm:$0x3]
  %v89 = vlaneseq
  %v90 = vshrl.u32 %v89, 7
  %v91 = vsub.s32 0, %v90
  %v92 = vrot.slane %v87, %v91
  %v93 = vlaneseq
  %v94 = vshrl.u32 %v93, 7
  %v95 = vsub.s32 1, %v94
  %v96 = vrot.slane %v87, %v95
  %v127 = vunpack.c.l.b16 %v39
  %v128 = vunpack.c.h.b16 %v39
  %v129 = vunpack.c.l.b16 %v40
  %v130 = vunpack.c.h.b16 %v40
  %v131 = vunpack.c.l.b16 %v41
  %v132 = vunpack.c.h.b16 %v41
  %v133 = vunpack.c.l.b16 %v42
  %v134 = vunpack.c.h.b16 %v42
  %v135 = vunpack.c.l.b16 %v43
  %v136 = vunpack.c.h.b16 %v43
  %v137 = vunpack.c.l.b16 %v44
  %v138 = vunpack.c.h.b16 %v44
  %v139 = vunpack.c.l.b16 %v45
  %v140 = vunpack.c.h.b16 %v45
  %v141 = vunpack.c.l.b16 %v46
  %v142 = vunpack.c.h.b16 %v46
  %v143 = vunpack.c.l.b16 %v47
  %v144 = vunpack.c.h.b16 %v47
  %v145 = vunpack.c.l.b16 %v48
  %v146 = vunpack.c.h.b16 %v48
  %v147 = vunpack.c.l.b16 %v49
  %v148 = vunpack.c.h.b16 %v49
  %v149 = vunpack.c.l.b16 %v50
  %v150 = vunpack.c.h.b16 %v50
  %v151 = vunpack.c.l.b16 %v51
  %v152 = vunpack.c.h.b16 %v51
  %v153 = vunpack.c.l.b16 %v52
  %v154 = vunpack.c.h.b16 %v52
  %v155 = vunpack.c.l.b16 %v53
  %v156 = vunpack.c.h.b16 %v53
  %v157 = vunpack.c.l.b16 %v54
  %v158 = vunpack.c.h.b16 %v54
  %v159 = vunpack.c.l.b16 %v55
  %v160 = vunpack.c.h.b16 %v55
  %v161 = vunpack.c.l.b16 %v56
  %v162 = vunpack.c.h.b16 %v56
  %v163 = vunpack.c.l.b16 %v57
  %v164 = vunpack.c.h.b16 %v57
  %v165 = vunpack.c.l.b16 %v58
  %v166 = vunpack.c.h.b16 %v58
  %v167 = vunpack.c.l.b16 %v59
  %v168 = vunpack.c.h.b16 %v59
  %v169 = vunpack.c.l.b16 %v60
  %v170 = vunpack.c.h.b16 %v60
  %v171 = vunpack.c.l.b16 %v61
  %v172 = vunpack.c.h.b16 %v61
  %v173 = vunpack.c.l.b16 %v62
  %v174 = vunpack.c.h.b16 %v62
  %v175 = vunpack.c.l.b16 %v63
  %v176 = vunpack.c.h.b16 %v63
  %v177 = vunpack.c.l.b16 %v64
  %v178 = vunpack.c.h.b16 %v64
  %v179 = vunpack.c.l.b16 %v65
  %v180 = vunpack.c.h.b16 %v65
  %v181 = vunpack.c.l.b16 %v66
  %v182 = vunpack.c.h.b16 %v66
  %v183 = vpack.c.b16 %v129, %v127
  %v184 = vpack.c.b16 %v130, %v128
  %v185 = vpack.c.b16 %v133, %v131
  %v186 = vpack.c.b16 %v134, %v132
  %v187 = vpack.c.b16 %v137, %v135
  %v188 = vpack.c.b16 %v138, %v136
  %v189 = vpack.c.b16 %v141, %v139
  %v190 = vpack.c.b16 %v142, %v140
  %v191 = vpack.c.b16 %v145, %v143
  %v192 = vpack.c.b16 %v146, %v144
  %v193 = vpack.c.b16 %v149, %v147
  %v194 = vpack.c.b16 %v150, %v148
  %v195 = vpack.c.b16 %v153, %v151
  %v196 = vpack.c.b16 %v154, %v152
  %v197 = vpack.c.b16 %v157, %v155
  %v198 = vpack.c.b16 %v158, %v156
  %v199 = vpack.c.b16 %v161, %v159
  %v200 = vpack.c.b16 %v162, %v160
  %v201 = vpack.c.b16 %v165, %v163
  %v202 = vpack.c.b16 %v166, %v164
  %v203 = vpack.c.b16 %v169, %v167
  %v204 = vpack.c.b16 %v170, %v168
  %v205 = vpack.c.b16 %v173, %v171
  %v206 = vpack.c.b16 %v174, %v172
  %v207 = vpack.c.b16 %v177, %v175
  %v208 = vpack.c.b16 %v178, %v176
  %v209 = vpack.c.b16 %v181, %v179
  %v210 = vpack.c.b16 %v182, %v180
  %v245 = vunpack.c.l.b16 %v67
  %v246 = vunpack.c.h.b16 %v67
  %v247 = vunpack.c.l.b16 %v68
  %v248 = vunpack.c.h.b16 %v68
  %v249 = vunpack.c.l.b16 %v69
  %v250 = vunpack.c.h.b16 %v69
  %v251 = vunpack.c.l.b16 %v70
  %v252 = vunpack.c.h.b16 %v70
  %v253 = vunpack.c.l.b16 %v71
  %v254 = vunpack.c.h.b16 %v71
  %v255 = vunpack.c.l.b16 %v72
  %v256 = vunpack.c.h.b16 %v72
  %v257 = vunpack.c.l.b16 %v73
  %v258 = vunpack.c.h.b16 %v73
  %v259 = vunpack.c.l.b16 %v74
  %v260 = vunpack.c.h.b16 %v74
  %v261 = vunpack.c.l.b16 %v75
  %v262 = vunpack.c.h.b16 %v75
  %v263 = vunpack.c.l.b16 %v76
  %v264 = vunpack.c.h.b16 %v76
  %v265 = vunpack.c.l.b16 %v77
  %v266 = vunpack.c.h.b16 %v77
  %v267 = vunpack.c.l.b16 %v78
  %v268 = vunpack.c.h.b16 %v78
  %v269 = vunpack.c.l.b16 %v79
  %v270 = vunpack.c.h.b16 %v79
  %v271 = vunpack.c.l.b16 %v80
  %v272 = vunpack.c.h.b16 %v80
  %v273 = vunpack.c.l.b16 %v81
  %v274 = vunpack.c.h.b16 %v81
  %v275 = vunpack.c.l.b16 %v82
  %v276 = vunpack.c.h.b16 %v82
  %v277 = vunpack.c.l.b16 %v83
  %v278 = vunpack.c.h.b16 %v83
  %v279 = vunpack.c.l.b16 %v84
  %v280 = vunpack.c.h.b16 %v84
  %v281 = vunpack.c.l.b16 %v85
  %v282 = vunpack.c.h.b16 %v85
  %v283 = vunpack.c.l.b16 %v86
  %v284 = vunpack.c.h.b16 %v86
  %v285 = vpack.c.b16 %v247, %v245
  %v286 = vpack.c.b16 %v248, %v246
  %v287 = vpack.c.b16 %v251, %v249
  %v288 = vpack.c.b16 %v252, %v250
  %v289 = vpack.c.b16 %v255, %v253
  %v290 = vpack.c.b16 %v256, %v254
  %v291 = vpack.c.b16 %v259, %v257
  %v292 = vpack.c.b16 %v260, %v258
  %v293 = vpack.c.b16 %v263, %v261
  %v294 = vpack.c.b16 %v264, %v262
  %v295 = vpack.c.b16 %v267, %v265
  %v296 = vpack.c.b16 %v268, %v266
  %v297 = vpack.c.b16 %v271, %v269
  %v298 = vpack.c.b16 %v272, %v270
  %v299 = vpack.c.b16 %v275, %v273
  %v300 = vpack.c.b16 %v276, %v274
  %v301 = vpack.c.b16 %v279, %v277
  %v302 = vpack.c.b16 %v280, %v278
  %v303 = vpack.c.b16 %v283, %v281
  %v304 = vpack.c.b16 %v284, %v282
  %vm325 = vcmask 261120
  %v327 = vsel %vm325, %v184, 0
  %v330 = vsel %vm325, %v186, 0
  %v333 = vsel %vm325, %v188, 0
  %v336 = vsel %vm325, %v190, 0
  %v339 = vsel %vm325, %v192, 0
  %v342 = vsel %vm325, %v194, 0
  %v345 = vsel %vm325, %v196, 0
  %v348 = vsel %vm325, %v198, 0
  %v351 = vsel %vm325, %v200, 0
  %v354 = vsel %vm325, %v202, 0
  %v357 = vsel %vm325, %v204, 0
  %v360 = vsel %vm325, %v206, 0
  %v363 = vsel %vm325, %v208, 0
  %v366 = vsel %vm325, %v210, 0
  %368 = vmatprep.subr.bf16.mxu0 %v300
  %369 = vmatpush1.bf16.msra.mxu0 %v299
  %370 = vmatprep.subr.bf16.mxu0 %v298
  %371 = vmatpush1.bf16.msra.mxu0 %v297
  %372 = vmatprep.subr.bf16.mxu0 %v296
  %373 = vmatpush1.bf16.msra.mxu0 %v295
  %374 = vmatprep.subr.bf16.mxu0 %v294
  %375 = vmatpush1.bf16.msra.mxu0 %v293
  %376 = vmatprep.subr.bf16.mxu0 %v292
  %377 = vmatpush1.bf16.msra.mxu0 %v291
  %378 = vmatprep.subr.bf16.mxu0 %v290
  %379 = vmatpush1.bf16.msra.mxu0 %v289
  %380 = vmatprep.subr.bf16.mxu0 %v288
  %381 = vmatpush1.bf16.msra.mxu0 %v287
  %382 = vmatprep.subr.bf16.mxu0 %v286
  %383 = vmatpush1.bf16.msra.mxu0 %v285
  %384 = vmatprep.subr.bf16.mxu0 0
  %385 = vmatpush2.bf16.msra.mxu0 0
  %386 = vmatprep.subr.bf16.mxu0 0
  %387 = vmatpush2.bf16.msra.mxu0 0
  %388 = vmatprep.subr.bf16.mxu0 0
  %389 = vmatpush2.bf16.msra.mxu0 0
  %390 = vmatprep.subr.bf16.mxu0 0
  %391 = vmatpush2.bf16.msra.mxu0 0
  %392 = vmatprep.subr.bf16.mxu0 0
  %393 = vmatpush2.bf16.msra.mxu0 0
  %394 = vmatprep.subr.bf16.mxu0 0
  %395 = vmatpush2.bf16.msra.mxu0 0
  %396 = vmatprep.subr.bf16.mxu0 %v304
  %397 = vmatpush2.bf16.msra.mxu0 %v303
  %398 = vmatprep.subr.bf16.mxu0 %v302
  %399 = vmatpush2.bf16.msra.mxu0 %v301
  %400 = vmatprep.mubr.bf16.mxu0 %v327
  %401 = vmatmul.mubr.bf16.gmra.mxu0 %v183
  %v402 = vpop.f32.mrf.mxu0
  %v403 = vadd.f32 %v92, %v402
  %v404 = vpop.f32.mrf.mxu0
  %v405 = vadd.f32 %v96, %v404
  %v406 = vpop.f32.mrf.mxu0
  %v407 = vadd.f32 %v92, %v406
  %v408 = vpop.f32.mrf.mxu0
  %v409 = vadd.f32 %v96, %v408
  %410 = vmatprep.mubr.bf16.mxu0 %v330
  %411 = vmatmul.mubr.bf16.gmra.mxu0 %v185
  %v412 = vpop.f32.mrf.mxu0
  %v413 = vadd.f32 %v92, %v412
  %v414 = vpop.f32.mrf.mxu0
  %v415 = vadd.f32 %v96, %v414
  %v416 = vpop.f32.mrf.mxu0
  %v417 = vadd.f32 %v92, %v416
  %v418 = vpop.f32.mrf.mxu0
  %v419 = vadd.f32 %v96, %v418
  %420 = vmatprep.mubr.bf16.mxu0 %v333
  %421 = vmatmul.mubr.bf16.gmra.mxu0 %v187
  %v422 = vpop.f32.mrf.mxu0
  %v423 = vadd.f32 %v92, %v422
  %v424 = vpop.f32.mrf.mxu0
  %v425 = vadd.f32 %v96, %v424
  %v426 = vpop.f32.mrf.mxu0
  %v427 = vadd.f32 %v92, %v426
  %v428 = vpop.f32.mrf.mxu0
  %v429 = vadd.f32 %v96, %v428
  %430 = vmatprep.mubr.bf16.mxu0 %v336
  %431 = vmatmul.mubr.bf16.gmra.mxu0 %v189
  %v432 = vpop.f32.mrf.mxu0
  %v433 = vadd.f32 %v92, %v432
  %v434 = vpop.f32.mrf.mxu0
  %v435 = vadd.f32 %v96, %v434
  %v436 = vpop.f32.mrf.mxu0
  %v437 = vadd.f32 %v92, %v436
  %v438 = vpop.f32.mrf.mxu0
  %v439 = vadd.f32 %v96, %v438
  %440 = vmatprep.mubr.bf16.mxu0 %v339
  %441 = vmatmul.mubr.bf16.gmra.mxu0 %v191
  %v442 = vpop.f32.mrf.mxu0
  %v443 = vadd.f32 %v92, %v442
  %v444 = vpop.f32.mrf.mxu0
  %v445 = vadd.f32 %v96, %v444
  %v446 = vpop.f32.mrf.mxu0
  %v447 = vadd.f32 %v92, %v446
  %v448 = vpop.f32.mrf.mxu0
  %v449 = vadd.f32 %v96, %v448
  %450 = vmatprep.mubr.bf16.mxu0 %v342
  %451 = vmatmul.mubr.bf16.gmra.mxu0 %v193
  %v452 = vpop.f32.mrf.mxu0
  %v453 = vadd.f32 %v92, %v452
  %v454 = vpop.f32.mrf.mxu0
  %v455 = vadd.f32 %v96, %v454
  %v456 = vpop.f32.mrf.mxu0
  %v457 = vadd.f32 %v92, %v456
  %v458 = vpop.f32.mrf.mxu0
  %v459 = vadd.f32 %v96, %v458
  %460 = vmatprep.mubr.bf16.mxu0 %v345
  %461 = vmatmul.mubr.bf16.gmra.mxu0 %v195
  %v462 = vpop.f32.mrf.mxu0
  %v463 = vadd.f32 %v92, %v462
  %v464 = vpop.f32.mrf.mxu0
  %v465 = vadd.f32 %v96, %v464
  %v466 = vpop.f32.mrf.mxu0
  %v467 = vadd.f32 %v92, %v466
  %v468 = vpop.f32.mrf.mxu0
  %v469 = vadd.f32 %v96, %v468
  %470 = vmatprep.mubr.bf16.mxu0 %v348
  %471 = vmatmul.mubr.bf16.gmra.mxu0 %v197
  %v472 = vpop.f32.mrf.mxu0
  %v473 = vadd.f32 %v92, %v472
  %v474 = vpop.f32.mrf.mxu0
  %v475 = vadd.f32 %v96, %v474
  %v476 = vpop.f32.mrf.mxu0
  %v477 = vadd.f32 %v92, %v476
  %v478 = vpop.f32.mrf.mxu0
  %v479 = vadd.f32 %v96, %v478
  %480 = vmatprep.mubr.bf16.mxu0 %v351
  %481 = vmatmul.mubr.bf16.gmra.mxu0 %v199
  %v482 = vpop.f32.mrf.mxu0
  %v483 = vadd.f32 %v92, %v482
  %v484 = vpop.f32.mrf.mxu0
  %v485 = vadd.f32 %v96, %v484
  %v486 = vpop.f32.mrf.mxu0
  %v487 = vadd.f32 %v92, %v486
  %v488 = vpop.f32.mrf.mxu0
  %v489 = vadd.f32 %v96, %v488
  %490 = vmatprep.mubr.bf16.mxu0 %v354
  %491 = vmatmul.mubr.bf16.gmra.mxu0 %v201
  %v492 = vpop.f32.mrf.mxu0
  %v493 = vadd.f32 %v92, %v492
  %v494 = vpop.f32.mrf.mxu0
  %v495 = vadd.f32 %v96, %v494
  %v496 = vpop.f32.mrf.mxu0
  %v497 = vadd.f32 %v92, %v496
  %v498 = vpop.f32.mrf.mxu0
  %v499 = vadd.f32 %v96, %v498
  %500 = vmatprep.mubr.bf16.mxu0 %v357
  %501 = vmatmul.mubr.bf16.gmra.mxu0 %v203
  %v502 = vpop.f32.mrf.mxu0
  %v503 = vadd.f32 %v92, %v502
  %v504 = vpop.f32.mrf.mxu0
  %v505 = vadd.f32 %v96, %v504
  %v506 = vpop.f32.mrf.mxu0
  %v507 = vadd.f32 %v92, %v506
  %v508 = vpop.f32.mrf.mxu0
  %v509 = vadd.f32 %v96, %v508
  %510 = vmatprep.mubr.bf16.mxu0 %v360
  %511 = vmatmul.mubr.bf16.gmra.mxu0 %v205
  %v512 = vpop.f32.mrf.mxu0
  %v513 = vadd.f32 %v92, %v512
  %v514 = vpop.f32.mrf.mxu0
  %v515 = vadd.f32 %v96, %v514
  %v516 = vpop.f32.mrf.mxu0
  %v517 = vadd.f32 %v92, %v516
  %v518 = vpop.f32.mrf.mxu0
  %v519 = vadd.f32 %v96, %v518
  %520 = vmatprep.mubr.bf16.mxu0 %v363
  %521 = vmatmul.mubr.bf16.gmra.mxu0 %v207
  %v522 = vpop.f32.mrf.mxu0
  %v523 = vadd.f32 %v92, %v522
  %v524 = vpop.f32.mrf.mxu0
  %v525 = vadd.f32 %v96, %v524
  %v526 = vpop.f32.mrf.mxu0
  %v527 = vadd.f32 %v92, %v526
  %v528 = vpop.f32.mrf.mxu0
  %v529 = vadd.f32 %v96, %v528
  %530 = vmatprep.mubr.bf16.mxu0 %v366
  %531 = vmatmul.mubr.bf16.gmra.mxu0 %v209
  %v532 = vpop.f32.mrf.mxu0
  %v533 = vadd.f32 %v92, %v532
  %v534 = vpop.f32.mrf.mxu0
  %v535 = vadd.f32 %v96, %v534
  %v536 = vpop.f32.mrf.mxu0
  %v537 = vadd.f32 %v92, %v536
  %v538 = vpop.f32.mrf.mxu0
  %v539 = vadd.f32 %v96, %v538
  %540 = vdwg.mxu0
  %v541 = vmax.f32 %v403, 0.0
  %v542 = vmax.f32 %v405, 0.0
  %v543 = vmax.f32 %v407, 0.0
  %v544 = vmax.f32 %v409, 0.0
  %v545 = vmax.f32 %v413, 0.0
  %v546 = vmax.f32 %v415, 0.0
  %v547 = vmax.f32 %v417, 0.0
  %v548 = vmax.f32 %v419, 0.0
  %v549 = vmax.f32 %v423, 0.0
  %v550 = vmax.f32 %v425, 0.0
  %v551 = vmax.f32 %v427, 0.0
  %v552 = vmax.f32 %v429, 0.0
  %v553 = vmax.f32 %v433, 0.0
  %v554 = vmax.f32 %v435, 0.0
  %v555 = vmax.f32 %v437, 0.0
  %v556 = vmax.f32 %v439, 0.0
  %v557 = vmax.f32 %v443, 0.0
  %v558 = vmax.f32 %v445, 0.0
  %v559 = vmax.f32 %v447, 0.0
  %v560 = vmax.f32 %v449, 0.0
  %v561 = vmax.f32 %v453, 0.0
  %v562 = vmax.f32 %v455, 0.0
  %v563 = vmax.f32 %v457, 0.0
  %v564 = vmax.f32 %v459, 0.0
  %v565 = vmax.f32 %v463, 0.0
  %v566 = vmax.f32 %v465, 0.0
  %v567 = vmax.f32 %v467, 0.0
  %v568 = vmax.f32 %v469, 0.0
  %v569 = vmax.f32 %v473, 0.0
  %v570 = vmax.f32 %v475, 0.0
  %v571 = vmax.f32 %v477, 0.0
  %v572 = vmax.f32 %v479, 0.0
  %v573 = vmax.f32 %v483, 0.0
  %v574 = vmax.f32 %v485, 0.0
  %v575 = vmax.f32 %v487, 0.0
  %v576 = vmax.f32 %v489, 0.0
  %v577 = vmax.f32 %v493, 0.0
  %v578 = vmax.f32 %v495, 0.0
  %v579 = vmax.f32 %v497, 0.0
  %v580 = vmax.f32 %v499, 0.0
  %v581 = vmax.f32 %v503, 0.0
  %v582 = vmax.f32 %v505, 0.0
  %v583 = vmax.f32 %v507, 0.0
  %v584 = vmax.f32 %v509, 0.0
  %v585 = vmax.f32 %v513, 0.0
  %v586 = vmax.f32 %v515, 0.0
  %v587 = vmax.f32 %v517, 0.0
  %v588 = vmax.f32 %v519, 0.0
  %v589 = vmax.f32 %v523, 0.0
  %v590 = vmax.f32 %v525, 0.0
  %v591 = vmax.f32 %v527, 0.0
  %v592 = vmax.f32 %v529, 0.0
  %v593 = vmax.f32 %v533, 0.0
  %v594 = vmax.f32 %v535, 0.0
  %v595 = vmax.f32 %v537, 0.0
  %v596 = vmax.f32 %v539, 0.0
  %v597 = vmax.f32 %v541, %v569
  %v598 = vmax.f32 %v542, %v570
  %v599 = vmax.f32 %v543, %v571
  %v600 = vmax.f32 %v544, %v572
  %v601 = vmax.f32 %v545, %v573
  %v602 = vmax.f32 %v546, %v574
  %v603 = vmax.f32 %v547, %v575
  %v604 = vmax.f32 %v548, %v576
  %v605 = vmax.f32 %v549, %v577
  %v606 = vmax.f32 %v550, %v578
  %v607 = vmax.f32 %v551, %v579
  %v608 = vmax.f32 %v552, %v580
  %v609 = vmax.f32 %v553, %v581
  %v610 = vmax.f32 %v554, %v582
  %v611 = vmax.f32 %v555, %v583
  %v612 = vmax.f32 %v556, %v584
  %v613 = vmax.f32 %v557, %v585
  %v614 = vmax.f32 %v558, %v586
  %v615 = vmax.f32 %v559, %v587
  %v616 = vmax.f32 %v560, %v588
  %v617 = vmax.f32 %v561, %v589
  %v618 = vmax.f32 %v562, %v590
  %v619 = vmax.f32 %v563, %v591
  %v620 = vmax.f32 %v564, %v592
  %v621 = vmax.f32 %v565, %v593
  %v622 = vmax.f32 %v566, %v594
  %v623 = vmax.f32 %v567, %v595
  %v624 = vmax.f32 %v568, %v596
  %653 = vrot.lane.b32.xlu0 %v597, 44
  %v654 = vpop.permute.xlu0 %653
  %655 = vrot.lane.b32.xlu0 %v598, 44
  %v656 = vpop.permute.xlu0 %655
  %657 = vrot.lane.b32.xlu0 %v599, 44
  %v658 = vpop.permute.xlu0 %657
  %659 = vrot.lane.b32.xlu0 %v600, 44
  %v660 = vpop.permute.xlu0 %659
  %661 = vrot.lane.b32.xlu0 %v601, 44
  %v662 = vpop.permute.xlu0 %661
  %663 = vrot.lane.b32.xlu0 %v602, 44
  %v664 = vpop.permute.xlu0 %663
  %665 = vrot.lane.b32.xlu0 %v603, 44
  %v666 = vpop.permute.xlu0 %665
  %667 = vrot.lane.b32.xlu0 %v604, 44
  %v668 = vpop.permute.xlu0 %667
  %669 = vrot.lane.b32.xlu0 %v605, 44
  %v670 = vpop.permute.xlu0 %669
  %671 = vrot.lane.b32.xlu0 %v606, 44
  %v672 = vpop.permute.xlu0 %671
  %673 = vrot.lane.b32.xlu0 %v607, 44
  %v674 = vpop.permute.xlu0 %673
  %675 = vrot.lane.b32.xlu0 %v608, 44
  %v676 = vpop.permute.xlu0 %675
  %677 = vrot.lane.b32.xlu0 %v609, 44
  %v678 = vpop.permute.xlu0 %677
  %679 = vrot.lane.b32.xlu0 %v610, 44
  %v680 = vpop.permute.xlu0 %679
  %681 = vrot.lane.b32.xlu0 %v611, 44
  %v682 = vpop.permute.xlu0 %681
  %683 = vrot.lane.b32.xlu0 %v612, 44
  %v684 = vpop.permute.xlu0 %683
  %685 = vrot.lane.b32.xlu0 %v613, 44
  %v686 = vpop.permute.xlu0 %685
  %687 = vrot.lane.b32.xlu0 %v614, 44
  %v688 = vpop.permute.xlu0 %687
  %689 = vrot.lane.b32.xlu0 %v615, 44
  %v690 = vpop.permute.xlu0 %689
  %691 = vrot.lane.b32.xlu0 %v616, 44
  %v692 = vpop.permute.xlu0 %691
  %693 = vrot.lane.b32.xlu0 %v617, 44
  %v694 = vpop.permute.xlu0 %693
  %695 = vrot.lane.b32.xlu0 %v618, 44
  %v696 = vpop.permute.xlu0 %695
  %697 = vrot.lane.b32.xlu0 %v619, 44
  %v698 = vpop.permute.xlu0 %697
  %699 = vrot.lane.b32.xlu0 %v620, 44
  %v700 = vpop.permute.xlu0 %699
  %701 = vrot.lane.b32.xlu0 %v621, 44
  %v702 = vpop.permute.xlu0 %701
  %703 = vrot.lane.b32.xlu0 %v622, 44
  %v704 = vpop.permute.xlu0 %703
  %705 = vrot.lane.b32.xlu0 %v623, 44
  %v706 = vpop.permute.xlu0 %705
  %707 = vrot.lane.b32.xlu0 %v624, 44
  %v708 = vpop.permute.xlu0 %707
  %vm709 = vcmask 359424
  %v710 = vsel %vm709, %v654, %v656
  %v711 = vsel %vm709, %v658, %v660
  %v712 = vsel %vm709, %v662, %v664
  %v713 = vsel %vm709, %v666, %v668
  %v714 = vsel %vm709, %v670, %v672
  %v715 = vsel %vm709, %v674, %v676
  %v716 = vsel %vm709, %v678, %v680
  %v717 = vsel %vm709, %v682, %v684
  %v718 = vsel %vm709, %v686, %v688
  %v719 = vsel %vm709, %v690, %v692
  %v720 = vsel %vm709, %v694, %v696
  %v721 = vsel %vm709, %v698, %v700
  %v722 = vsel %vm709, %v702, %v704
  %v723 = vsel %vm709, %v706, %v708
  %v738 = vmax.f32 %v597, %v710
  %v739 = vmax.f32 %v599, %v711
  %v740 = vmax.f32 %v601, %v712
  %v741 = vmax.f32 %v603, %v713
  %v742 = vmax.f32 %v605, %v714
  %v743 = vmax.f32 %v607, %v715
  %v744 = vmax.f32 %v609, %v716
  %v745 = vmax.f32 %v611, %v717
  %v746 = vmax.f32 %v613, %v718
  %v747 = vmax.f32 %v615, %v719
  %v748 = vmax.f32 %v617, %v720
  %v749 = vmax.f32 %v619, %v721
  %v750 = vmax.f32 %v621, %v722
  %v751 = vmax.f32 %v623, %v723
  %762 = vrot.lane.b32.xlu0 %v739, 84
  %v763 = vpop.permute.xlu0 %762
  %764 = vrot.lane.b32.xlu0 %v740, 84
  %v765 = vpop.permute.xlu0 %764
  %766 = vrot.lane.b32.xlu0 %v741, 84
  %v767 = vpop.permute.xlu0 %766
  %768 = vrot.lane.b32.xlu0 %v742, 84
  %v769 = vpop.permute.xlu0 %768
  %770 = vrot.lane.b32.xlu0 %v743, 84
  %v771 = vpop.permute.xlu0 %770
  %772 = vrot.lane.b32.xlu0 %v744, 84
  %v773 = vpop.permute.xlu0 %772
  %774 = vrot.lane.b32.xlu0 %v745, 84
  %v775 = vpop.permute.xlu0 %774
  %776 = vrot.lane.b32.xlu0 %v746, 84
  %v777 = vpop.permute.xlu0 %776
  %778 = vrot.lane.b32.xlu0 %v747, 84
  %v779 = vpop.permute.xlu0 %778
  %780 = vrot.lane.b32.xlu0 %v748, 84
  %v781 = vpop.permute.xlu0 %780
  %793 = vrot.lane.b32.xlu0 %v740, 40
  %v794 = vpop.permute.xlu0 %793
  %795 = vrot.lane.b32.xlu0 %v741, 40
  %v796 = vpop.permute.xlu0 %795
  %797 = vrot.lane.b32.xlu0 %v742, 40
  %v798 = vpop.permute.xlu0 %797
  %799 = vrot.lane.b32.xlu0 %v743, 40
  %v800 = vpop.permute.xlu0 %799
  %801 = vrot.lane.b32.xlu0 %v744, 40
  %v802 = vpop.permute.xlu0 %801
  %803 = vrot.lane.b32.xlu0 %v745, 40
  %v804 = vpop.permute.xlu0 %803
  %805 = vrot.lane.b32.xlu0 %v746, 40
  %v806 = vpop.permute.xlu0 %805
  %807 = vrot.lane.b32.xlu0 %v747, 40
  %v808 = vpop.permute.xlu0 %807
  %809 = vrot.lane.b32.xlu0 %v748, 40
  %v810 = vpop.permute.xlu0 %809
  %811 = vrot.lane.b32.xlu0 %v749, 40
  %v812 = vpop.permute.xlu0 %811
  %824 = vrot.lane.b32.xlu0 %v741, 124
  %v825 = vpop.permute.xlu0 %824
  %826 = vrot.lane.b32.xlu0 %v742, 124
  %v827 = vpop.permute.xlu0 %826
  %828 = vrot.lane.b32.xlu0 %v743, 124
  %v829 = vpop.permute.xlu0 %828
  %830 = vrot.lane.b32.xlu0 %v744, 124
  %v831 = vpop.permute.xlu0 %830
  %832 = vrot.lane.b32.xlu0 %v745, 124
  %v833 = vpop.permute.xlu0 %832
  %834 = vrot.lane.b32.xlu0 %v746, 124
  %v835 = vpop.permute.xlu0 %834
  %836 = vrot.lane.b32.xlu0 %v747, 124
  %v837 = vpop.permute.xlu0 %836
  %838 = vrot.lane.b32.xlu0 %v748, 124
  %v839 = vpop.permute.xlu0 %838
  %840 = vrot.lane.b32.xlu0 %v749, 124
  %v841 = vpop.permute.xlu0 %840
  %842 = vrot.lane.b32.xlu0 %v750, 124
  %v843 = vpop.permute.xlu0 %842
  %855 = vrot.lane.b32.xlu0 %v742, 80
  %v856 = vpop.permute.xlu0 %855
  %857 = vrot.lane.b32.xlu0 %v743, 80
  %v858 = vpop.permute.xlu0 %857
  %859 = vrot.lane.b32.xlu0 %v744, 80
  %v860 = vpop.permute.xlu0 %859
  %861 = vrot.lane.b32.xlu0 %v745, 80
  %v862 = vpop.permute.xlu0 %861
  %863 = vrot.lane.b32.xlu0 %v746, 80
  %v864 = vpop.permute.xlu0 %863
  %865 = vrot.lane.b32.xlu0 %v747, 80
  %v866 = vpop.permute.xlu0 %865
  %867 = vrot.lane.b32.xlu0 %v748, 80
  %v868 = vpop.permute.xlu0 %867
  %869 = vrot.lane.b32.xlu0 %v749, 80
  %v870 = vpop.permute.xlu0 %869
  %871 = vrot.lane.b32.xlu0 %v750, 80
  %v872 = vpop.permute.xlu0 %871
  %873 = vrot.lane.b32.xlu0 %v751, 80
  %v874 = vpop.permute.xlu0 %873
  %vm885 = vcmask 687104
  %v886 = vsel %vm885, %v738, %v763
  %v887 = vsel %vm885, %v739, %v765
  %v888 = vsel %vm885, %v740, %v767
  %v889 = vsel %vm885, %v741, %v769
  %v890 = vsel %vm885, %v742, %v771
  %v891 = vsel %vm885, %v743, %v773
  %v892 = vsel %vm885, %v744, %v775
  %v893 = vsel %vm885, %v745, %v777
  %v894 = vsel %vm885, %v746, %v779
  %v895 = vsel %vm885, %v747, %v781
  %vm896 = vcmask 326656
  %v897 = vsel %vm896, %v763, %v794
  %v898 = vsel %vm896, %v765, %v796
  %v899 = vsel %vm896, %v767, %v798
  %v900 = vsel %vm896, %v769, %v800
  %v901 = vsel %vm896, %v771, %v802
  %v902 = vsel %vm896, %v773, %v804
  %v903 = vsel %vm896, %v775, %v806
  %v904 = vsel %vm896, %v777, %v808
  %v905 = vsel %vm896, %v779, %v810
  %v906 = vsel %vm896, %v781, %v812
  %vm907 = vcmask 1014784
  %v908 = vsel %vm907, %v897, %v825
  %v909 = vsel %vm907, %v898, %v827
  %v910 = vsel %vm907, %v899, %v829
  %v911 = vsel %vm907, %v900, %v831
  %v912 = vsel %vm907, %v901, %v833
  %v913 = vsel %vm907, %v902, %v835
  %v914 = vsel %vm907, %v903, %v837
  %v915 = vsel %vm907, %v904, %v839
  %v916 = vsel %vm907, %v905, %v841
  %v917 = vsel %vm907, %v906, %v843
  %vm918 = vcmask 654336
  %v919 = vsel %vm918, %v825, %v856
  %v920 = vsel %vm918, %v827, %v858
  %v921 = vsel %vm918, %v829, %v860
  %v922 = vsel %vm918, %v831, %v862
  %v923 = vsel %vm918, %v833, %v864
  %v924 = vsel %vm918, %v835, %v866
  %v925 = vsel %vm918, %v837, %v868
  %v926 = vsel %vm918, %v839, %v870
  %v927 = vsel %vm918, %v841, %v872
  %v928 = vsel %vm918, %v843, %v874
  %v929 = vpack.c.bf16 %v887, %v886
  %v930 = vpack.c.bf16 %v909, %v908
  %v931 = vpack.c.bf16 %v920, %v919
  %v932 = vpack.c.bf16 %v858, %v856
  %v933 = vpack.c.bf16 %v889, %v888
  %v934 = vpack.c.bf16 %v911, %v910
  %v935 = vpack.c.bf16 %v922, %v921
  %v936 = vpack.c.bf16 %v862, %v860
  %v937 = vpack.c.bf16 %v891, %v890
  %v938 = vpack.c.bf16 %v913, %v912
  %v939 = vpack.c.bf16 %v924, %v923
  %v940 = vpack.c.bf16 %v866, %v864
  %v941 = vpack.c.bf16 %v893, %v892
  %v942 = vpack.c.bf16 %v915, %v914
  %v943 = vpack.c.bf16 %v926, %v925
  %v944 = vpack.c.bf16 %v870, %v868
  %v945 = vpack.c.bf16 %v895, %v894
  %v946 = vpack.c.bf16 %v917, %v916
  %v947 = vpack.c.bf16 %v928, %v927
  %v948 = vpack.c.bf16 %v874, %v872
  %v949 = vld [vmem:[%s3] sm:$0xff]
  %v950 = vld [vmem:[%s3 + $0x8] sm:$0xff]
  %v951 = vld [vmem:[%s3 + $0x10] sm:$0xff]
  %v952 = vld [vmem:[%s3 + $0x18] sm:$0xff]
  %v953 = vld [vmem:[%s3 + $0x20] sm:$0xff]
  %v954 = vld [vmem:[%s3 + $0x28] sm:$0xff]
  %v955 = vld [vmem:[%s3 + $0x30] sm:$0xff]
  %v956 = vld [vmem:[%s3 + $0x38] sm:$0xff]
  %v957 = vld [vmem:[%s3 + $0x40] sm:$0xff]
  %v958 = vld [vmem:[%s3 + $0x48] sm:$0xff]
  %v959 = vld [vmem:[%s3 + $0x50] sm:$0xff]
  %v960 = vld [vmem:[%s3 + $0x58] sm:$0xff]
  %v961 = vld [vmem:[%s3 + $0x60] sm:$0xff]
  %v962 = vld [vmem:[%s3 + $0x68] sm:$0xff]
  %v963 = vld [vmem:[%s3 + $0x70] sm:$0xff]
  %v964 = vld [vmem:[%s3 + $0x78] sm:$0xff]
  %v965 = vld [vmem:[%s3 + $0x80] sm:$0xff]
  %v966 = vld [vmem:[%s3 + $0x88] sm:$0xff]
  %v967 = vld [vmem:[%s3 + $0x90] sm:$0xff]
  %v968 = vld [vmem:[%s3 + $0x98] sm:$0xff]
  %v969 = vld [vmem:[%s3 + $0xa0] sm:$0xff]
  %v970 = vld [vmem:[%s3 + $0xa8] sm:$0xff]
  %v971 = vld [vmem:[%s3 + $0xb0] sm:$0xff]
  %v972 = vld [vmem:[%s3 + $0xb8] sm:$0xff]
  %v973 = vld [vmem:[%s3 + $0xc0] sm:$0xff]
  %v974 = vld [vmem:[%s3 + $0xc8] sm:$0xff]
  %v975 = vld [vmem:[%s3 + $0xd0] sm:$0xff]
  %v976 = vld [vmem:[%s3 + $0xd8] sm:$0xff]
  %v977 = vld [vmem:[%s3 + $0xe0] sm:$0xff]
  %v978 = vld [vmem:[%s3 + $0xe8] sm:$0xff]
  %v979 = vld [vmem:[%s3 + $0xf0] sm:$0xff]
  %v980 = vld [vmem:[%s3 + $0xf8] sm:$0xff]
  %v981 = vld [vmem:[%s3 + $0x100] sm:$0xff]
  %v982 = vld [vmem:[%s3 + $0x108] sm:$0xff]
  %v983 = vld [vmem:[%s3 + $0x110] sm:$0xff]
  %v984 = vld [vmem:[%s3 + $0x118] sm:$0xff]
  %v985 = vld [vmem:[%s3 + $0x120] sm:$0xff]
  %v986 = vld [vmem:[%s3 + $0x128] sm:$0xff]
  %v987 = vld [vmem:[%s3 + $0x130] sm:$0xff]
  %v988 = vld [vmem:[%s3 + $0x138] sm:$0xff]
  %v989 = vld [vmem:[%s3 + $0x140] sm:$0xff]
  %v990 = vld [vmem:[%s3 + $0x148] sm:$0xff]
  %v991 = vld [vmem:[%s3 + $0x150] sm:$0xff]
  %v992 = vld [vmem:[%s3 + $0x158] sm:$0xff]
  %v993 = vld [vmem:[%s3 + $0x160] sm:$0xff]
  %v994 = vld [vmem:[%s3 + $0x168] sm:$0xff]
  %v995 = vld [vmem:[%s3 + $0x170] sm:$0xff]
  %v996 = vld [vmem:[%s3 + $0x178] sm:$0xff]
  %v997 = vld [vmem:[%s3 + $0x180] sm:$0xff]
  %v998 = vld [vmem:[%s3 + $0x188] sm:$0xff]
  %v999 = vld [vmem:[%s3 + $0x190] sm:$0xff]
  %v1000 = vld [vmem:[%s3 + $0x198] sm:$0xff]
  %v1001 = vld [vmem:[%s3 + $0x1a0] sm:$0x33]
  %v1002 = vld [vmem:[%s4] sm:$0x3]
  %v1004 = vlaneseq
  %v1005 = vshrl.u32 %v1004, 7
  %v1006 = vsub.s32 0, %v1005
  %v1007 = vrot.slane %v1002, %v1006
  %v1008 = vlaneseq
  %v1009 = vshrl.u32 %v1008, 7
  %v1010 = vsub.s32 1, %v1009
  %v1011 = vrot.slane %v1002, %v1010
  %v1067 = vunpack.c.l.b16 %v949
  %v1068 = vunpack.c.h.b16 %v949
  %v1069 = vunpack.c.l.b16 %v950
  %v1070 = vunpack.c.h.b16 %v950
  %v1071 = vunpack.c.l.b16 %v951
  %v1072 = vunpack.c.h.b16 %v951
  %v1073 = vunpack.c.l.b16 %v952
  %v1074 = vunpack.c.h.b16 %v952
  %v1075 = vunpack.c.l.b16 %v953
  %v1076 = vunpack.c.h.b16 %v953
  %v1077 = vunpack.c.l.b16 %v954
  %v1078 = vunpack.c.h.b16 %v954
  %v1079 = vunpack.c.l.b16 %v955
  %v1080 = vunpack.c.h.b16 %v955
  %v1081 = vunpack.c.l.b16 %v956
  %v1082 = vunpack.c.h.b16 %v956
  %v1083 = vunpack.c.l.b16 %v957
  %v1084 = vunpack.c.h.b16 %v957
  %v1085 = vunpack.c.l.b16 %v958
  %v1086 = vunpack.c.h.b16 %v958
  %v1087 = vunpack.c.l.b16 %v959
  %v1088 = vunpack.c.h.b16 %v959
  %v1089 = vunpack.c.l.b16 %v960
  %v1090 = vunpack.c.h.b16 %v960
  %v1091 = vunpack.c.l.b16 %v961
  %v1092 = vunpack.c.h.b16 %v961
  %v1093 = vunpack.c.l.b16 %v962
  %v1094 = vunpack.c.h.b16 %v962
  %v1095 = vunpack.c.l.b16 %v963
  %v1096 = vunpack.c.h.b16 %v963
  %v1097 = vunpack.c.l.b16 %v964
  %v1098 = vunpack.c.h.b16 %v964
  %v1099 = vunpack.c.l.b16 %v965
  %v1100 = vunpack.c.h.b16 %v965
  %v1101 = vunpack.c.l.b16 %v966
  %v1102 = vunpack.c.h.b16 %v966
  %v1103 = vunpack.c.l.b16 %v967
  %v1104 = vunpack.c.h.b16 %v967
  %v1105 = vunpack.c.l.b16 %v968
  %v1106 = vunpack.c.h.b16 %v968
  %v1107 = vunpack.c.l.b16 %v969
  %v1108 = vunpack.c.h.b16 %v969
  %v1109 = vunpack.c.l.b16 %v970
  %v1110 = vunpack.c.h.b16 %v970
  %v1111 = vunpack.c.l.b16 %v971
  %v1112 = vunpack.c.h.b16 %v971
  %v1113 = vunpack.c.l.b16 %v972
  %v1114 = vunpack.c.h.b16 %v972
  %v1115 = vunpack.c.l.b16 %v973
  %v1116 = vunpack.c.h.b16 %v973
  %v1117 = vunpack.c.l.b16 %v974
  %v1118 = vunpack.c.h.b16 %v974
  %v1119 = vunpack.c.l.b16 %v975
  %v1120 = vunpack.c.h.b16 %v975
  %v1121 = vunpack.c.l.b16 %v976
  %v1122 = vunpack.c.h.b16 %v976
  %v1123 = vunpack.c.l.b16 %v977
  %v1124 = vunpack.c.h.b16 %v977
  %v1125 = vunpack.c.l.b16 %v978
  %v1126 = vunpack.c.h.b16 %v978
  %v1127 = vunpack.c.l.b16 %v979
  %v1128 = vunpack.c.h.b16 %v979
  %v1129 = vunpack.c.l.b16 %v980
  %v1130 = vunpack.c.h.b16 %v980
  %v1131 = vunpack.c.l.b16 %v981
  %v1132 = vunpack.c.h.b16 %v981
  %v1133 = vunpack.c.l.b16 %v982
  %v1134 = vunpack.c.h.b16 %v982
  %v1135 = vunpack.c.l.b16 %v983
  %v1136 = vunpack.c.h.b16 %v983
  %v1137 = vunpack.c.l.b16 %v984
  %v1138 = vunpack.c.h.b16 %v984
  %v1139 = vunpack.c.l.b16 %v985
  %v1140 = vunpack.c.h.b16 %v985
  %v1141 = vunpack.c.l.b16 %v986
  %v1142 = vunpack.c.h.b16 %v986
  %v1143 = vunpack.c.l.b16 %v987
  %v1144 = vunpack.c.h.b16 %v987
  %v1145 = vunpack.c.l.b16 %v988
  %v1146 = vunpack.c.h.b16 %v988
  %v1147 = vunpack.c.l.b16 %v989
  %v1148 = vunpack.c.h.b16 %v989
  %v1149 = vunpack.c.l.b16 %v990
  %v1150 = vunpack.c.h.b16 %v990
  %v1151 = vunpack.c.l.b16 %v991
  %v1152 = vunpack.c.h.b16 %v991
  %v1153 = vunpack.c.l.b16 %v992
  %v1154 = vunpack.c.h.b16 %v992
  %v1155 = vunpack.c.l.b16 %v993
  %v1156 = vunpack.c.h.b16 %v993
  %v1157 = vunpack.c.l.b16 %v994
  %v1158 = vunpack.c.h.b16 %v994
  %v1159 = vunpack.c.l.b16 %v995
  %v1160 = vunpack.c.h.b16 %v995
  %v1161 = vunpack.c.l.b16 %v996
  %v1162 = vunpack.c.h.b16 %v996
  %v1163 = vunpack.c.l.b16 %v997
  %v1164 = vunpack.c.h.b16 %v997
  %v1165 = vunpack.c.l.b16 %v998
  %v1166 = vunpack.c.h.b16 %v998
  %v1167 = vunpack.c.l.b16 %v999
  %v1168 = vunpack.c.h.b16 %v999
  %v1169 = vunpack.c.l.b16 %v1000
  %v1170 = vunpack.c.h.b16 %v1000
  %v1171 = vunpack.c.l.b16 %v1001
  %v1172 = vunpack.c.h.b16 %v1001
  %v1173 = vpack.c.b16 %v1069, %v1067
  %v1174 = vpack.c.b16 %v1070, %v1068
  %v1175 = vpack.c.b16 %v1073, %v1071
  %v1176 = vpack.c.b16 %v1074, %v1072
  %v1177 = vpack.c.b16 %v1077, %v1075
  %v1178 = vpack.c.b16 %v1078, %v1076
  %v1179 = vpack.c.b16 %v1081, %v1079
  %v1180 = vpack.c.b16 %v1082, %v1080
  %v1181 = vpack.c.b16 %v1085, %v1083
  %v1182 = vpack.c.b16 %v1086, %v1084
  %v1183 = vpack.c.b16 %v1089, %v1087
  %v1184 = vpack.c.b16 %v1090, %v1088
  %v1185 = vpack.c.b16 %v1093, %v1091
  %v1186 = vpack.c.b16 %v1094, %v1092
  %v1187 = vpack.c.b16 %v1097, %v1095
  %v1188 = vpack.c.b16 %v1098, %v1096
  %v1189 = vpack.c.b16 %v1101, %v1099
  %v1190 = vpack.c.b16 %v1102, %v1100
  %v1191 = vpack.c.b16 %v1105, %v1103
  %v1192 = vpack.c.b16 %v1106, %v1104
  %v1193 = vpack.c.b16 %v1109, %v1107
  %v1194 = vpack.c.b16 %v1110, %v1108
  %v1195 = vpack.c.b16 %v1113, %v1111
  %v1196 = vpack.c.b16 %v1114, %v1112
  %v1197 = vpack.c.b16 %v1117, %v1115
  %v1198 = vpack.c.b16 %v1118, %v1116
  %v1199 = vpack.c.b16 %v1121, %v1119
  %v1200 = vpack.c.b16 %v1122, %v1120
  %v1201 = vpack.c.b16 %v1125, %v1123
  %v1202 = vpack.c.b16 %v1126, %v1124
  %v1203 = vpack.c.b16 %v1129, %v1127
  %v1204 = vpack.c.b16 %v1130, %v1128
  %v1205 = vpack.c.b16 %v1133, %v1131
  %v1206 = vpack.c.b16 %v1134, %v1132
  %v1207 = vpack.c.b16 %v1137, %v1135
  %v1208 = vpack.c.b16 %v1138, %v1136
  %v1209 = vpack.c.b16 %v1141, %v1139
  %v1210 = vpack.c.b16 %v1142, %v1140
  %v1211 = vpack.c.b16 %v1145, %v1143
  %v1212 = vpack.c.b16 %v1146, %v1144
  %v1213 = vpack.c.b16 %v1149, %v1147
  %v1214 = vpack.c.b16 %v1150, %v1148
  %v1215 = vpack.c.b16 %v1153, %v1151
  %v1216 = vpack.c.b16 %v1154, %v1152
  %v1217 = vpack.c.b16 %v1157, %v1155
  %v1218 = vpack.c.b16 %v1158, %v1156
  %v1219 = vpack.c.b16 %v1161, %v1159
  %v1220 = vpack.c.b16 %v1162, %v1160
  %v1221 = vpack.c.b16 %v1165, %v1163
  %v1222 = vpack.c.b16 %v1166, %v1164
  %v1223 = vpack.c.b16 %v1169, %v1167
  %v1224 = vpack.c.b16 %v1170, %v1168
  %v1225 = vpack.c.b16 %v1171, %v1171
  %v1226 = vpack.c.b16 %v1172, %v1172
  %vm1279 = vcmask 293888
  %v1281 = vsel %vm1279, %v932, 0
  %v1284 = vsel %vm1279, %v936, 0
  %v1287 = vsel %vm1279, %v940, 0
  %v1290 = vsel %vm1279, %v944, 0
  %v1293 = vsel %vm1279, %v948, 0
  %vm1295 = vcmask 1041408
  %v1297 = vsel %vm1295, %v1225, 0
  %v1300 = vsel %vm1295, %v1226, 0
  %1302 = vmatprep.subr.bf16.mxu0 %v1188
  %1303 = vmatpush1.bf16.msra.mxu0 %v1187
  %1304 = vmatprep.subr.bf16.mxu0 %v1186
  %1305 = vmatpush1.bf16.msra.mxu0 %v1185
  %1306 = vmatprep.subr.bf16.mxu0 %v1184
  %1307 = vmatpush1.bf16.msra.mxu0 %v1183
  %1308 = vmatprep.subr.bf16.mxu0 %v1182
  %1309 = vmatpush1.bf16.msra.mxu0 %v1181
  %1310 = vmatprep.subr.bf16.mxu0 %v1180
  %1311 = vmatpush1.bf16.msra.mxu0 %v1179
  %1312 = vmatprep.subr.bf16.mxu0 %v1178
  %1313 = vmatpush1.bf16.msra.mxu0 %v1177
  %1314 = vmatprep.subr.bf16.mxu0 %v1176
  %1315 = vmatpush1.bf16.msra.mxu0 %v1175
  %1316 = vmatprep.subr.bf16.mxu0 %v1174
  %1317 = vmatpush1.bf16.msra.mxu0 %v1173
  %1318 = vmatprep.subr.bf16.mxu0 %v1204
  %1319 = vmatpush2.bf16.msra.mxu0 %v1203
  %1320 = vmatprep.subr.bf16.mxu0 %v1202
  %1321 = vmatpush2.bf16.msra.mxu0 %v1201
  %1322 = vmatprep.subr.bf16.mxu0 %v1200
  %1323 = vmatpush2.bf16.msra.mxu0 %v1199
  %1324 = vmatprep.subr.bf16.mxu0 %v1198
  %1325 = vmatpush2.bf16.msra.mxu0 %v1197
  %1326 = vmatprep.subr.bf16.mxu0 %v1196
  %1327 = vmatpush2.bf16.msra.mxu0 %v1195
  %1328 = vmatprep.subr.bf16.mxu0 %v1194
  %1329 = vmatpush2.bf16.msra.mxu0 %v1193
  %1330 = vmatprep.subr.bf16.mxu0 %v1192
  %1331 = vmatpush2.bf16.msra.mxu0 %v1191
  %1332 = vmatprep.subr.bf16.mxu0 %v1190
  %1333 = vmatpush2.bf16.msra.mxu0 %v1189
  %1334 = vmatprep.mubr.bf16.mxu0 %v930
  %1335 = vmatmul.mubr.bf16.gmra.mxu0 %v929
  %v1336 = vpop.f32.mrf.mxu0
  %v1337 = vadd.f32 %v1007, %v1336
  %v1338 = vpop.f32.mrf.mxu0
  %v1339 = vadd.f32 %v1011, %v1338
  %v1340 = vpop.f32.mrf.mxu0
  %v1341 = vadd.f32 %v1007, %v1340
  %v1342 = vpop.f32.mrf.mxu0
  %v1343 = vadd.f32 %v1011, %v1342
  %1344 = vmatprep.mubr.bf16.mxu0 %v934
  %1345 = vmatmul.mubr.bf16.gmra.mxu0 %v933
  %v1346 = vpop.f32.mrf.mxu0
  %v1347 = vadd.f32 %v1007, %v1346
  %v1348 = vpop.f32.mrf.mxu0
  %v1349 = vadd.f32 %v1011, %v1348
  %v1350 = vpop.f32.mrf.mxu0
  %v1351 = vadd.f32 %v1007, %v1350
  %v1352 = vpop.f32.mrf.mxu0
  %v1353 = vadd.f32 %v1011, %v1352
  %1354 = vmatprep.mubr.bf16.mxu0 %v938
  %1355 = vmatmul.mubr.bf16.gmra.mxu0 %v937
  %v1356 = vpop.f32.mrf.mxu0
  %v1357 = vadd.f32 %v1007, %v1356
  %v1358 = vpop.f32.mrf.mxu0
  %v1359 = vadd.f32 %v1011, %v1358
  %v1360 = vpop.f32.mrf.mxu0
  %v1361 = vadd.f32 %v1007, %v1360
  %v1362 = vpop.f32.mrf.mxu0
  %v1363 = vadd.f32 %v1011, %v1362
  %1364 = vmatprep.mubr.bf16.mxu0 %v942
  %1365 = vmatmul.mubr.bf16.gmra.mxu0 %v941
  %v1366 = vpop.f32.mrf.mxu0
  %v1367 = vadd.f32 %v1007, %v1366
  %v1368 = vpop.f32.mrf.mxu0
  %v1369 = vadd.f32 %v1011, %v1368
  %v1370 = vpop.f32.mrf.mxu0
  %v1371 = vadd.f32 %v1007, %v1370
  %v1372 = vpop.f32.mrf.mxu0
  %v1373 = vadd.f32 %v1011, %v1372
  %1374 = vmatprep.mubr.bf16.mxu0 %v946
  %1375 = vmatmul.mubr.bf16.gmra.mxu0 %v945
  %v1376 = vpop.f32.mrf.mxu0
  %v1377 = vadd.f32 %v1007, %v1376
  %v1378 = vpop.f32.mrf.mxu0
  %v1379 = vadd.f32 %v1011, %v1378
  %v1380 = vpop.f32.mrf.mxu0
  %v1381 = vadd.f32 %v1007, %v1380
  %v1382 = vpop.f32.mrf.mxu0
  %v1383 = vadd.f32 %v1011, %v1382
  %1384 = vdwg.mxu0
  %1385 = vmatprep.subr.bf16.mxu0 %v1220
  %1386 = vmatpush1.bf16.msra.mxu0 %v1219
  %1387 = vmatprep.subr.bf16.mxu0 %v1218
  %1388 = vmatpush1.bf16.msra.mxu0 %v1217
  %1389 = vmatprep.subr.bf16.mxu0 %v1216
  %1390 = vmatpush1.bf16.msra.mxu0 %v1215
  %1391 = vmatprep.subr.bf16.mxu0 %v1214
  %1392 = vmatpush1.bf16.msra.mxu0 %v1213
  %1393 = vmatprep.subr.bf16.mxu0 %v1212
  %1394 = vmatpush1.bf16.msra.mxu0 %v1211
  %1395 = vmatprep.subr.bf16.mxu0 %v1210
  %1396 = vmatpush1.bf16.msra.mxu0 %v1209
  %1397 = vmatprep.subr.bf16.mxu0 %v1208
  %1398 = vmatpush1.bf16.msra.mxu0 %v1207
  %1399 = vmatprep.subr.bf16.mxu0 %v1206
  %1400 = vmatpush1.bf16.msra.mxu0 %v1205
  %1401 = vmatprep.subr.bf16.mxu0 0
  %1402 = vmatpush2.bf16.msra.mxu0 0
  %1403 = vmatprep.subr.bf16.mxu0 0
  %1404 = vmatpush2.bf16.msra.mxu0 0
  %1405 = vmatprep.subr.bf16.mxu0 0
  %1406 = vmatpush2.bf16.msra.mxu0 0
  %1407 = vmatprep.subr.bf16.mxu0 0
  %1408 = vmatpush2.bf16.msra.mxu0 0
  %1409 = vmatprep.subr.bf16.mxu0 0
  %1410 = vmatpush2.bf16.msra.mxu0 0
  %1411 = vmatprep.subr.bf16.mxu0 %v1300
  %1412 = vmatpush2.bf16.msra.mxu0 %v1297
  %1413 = vmatprep.subr.bf16.mxu0 %v1224
  %1414 = vmatpush2.bf16.msra.mxu0 %v1223
  %1415 = vmatprep.subr.bf16.mxu0 %v1222
  %1416 = vmatpush2.bf16.msra.mxu0 %v1221
  %1417 = vmatprep.mubr.bf16.mxu0 %v1281
  %1418 = vmatmul.mubr.bf16.gmra.mxu0 %v931
  %v1419 = vpop.f32.mrf.mxu0
  %v1420 = vadd.f32 %v1337, %v1419
  %v1421 = vpop.f32.mrf.mxu0
  %v1422 = vadd.f32 %v1339, %v1421
  %v1423 = vpop.f32.mrf.mxu0
  %v1424 = vadd.f32 %v1341, %v1423
  %v1425 = vpop.f32.mrf.mxu0
  %v1426 = vadd.f32 %v1343, %v1425
  %1427 = vmatprep.mubr.bf16.mxu0 %v1284
  %1428 = vmatmul.mubr.bf16.gmra.mxu0 %v935
  %v1429 = vpop.f32.mrf.mxu0
  %v1430 = vadd.f32 %v1347, %v1429
  %v1431 = vpop.f32.mrf.mxu0
  %v1432 = vadd.f32 %v1349, %v1431
  %v1433 = vpop.f32.mrf.mxu0
  %v1434 = vadd.f32 %v1351, %v1433
  %v1435 = vpop.f32.mrf.mxu0
  %v1436 = vadd.f32 %v1353, %v1435
  %1437 = vmatprep.mubr.bf16.mxu0 %v1287
  %1438 = vmatmul.mubr.bf16.gmra.mxu0 %v939
  %v1439 = vpop.f32.mrf.mxu0
  %v1440 = vadd.f32 %v1357, %v1439
  %v1441 = vpop.f32.mrf.mxu0
  %v1442 = vadd.f32 %v1359, %v1441
  %v1443 = vpop.f32.mrf.mxu0
  %v1444 = vadd.f32 %v1361, %v1443
  %v1445 = vpop.f32.mrf.mxu0
  %v1446 = vadd.f32 %v1363, %v1445
  %1447 = vmatprep.mubr.bf16.mxu0 %v1290
  %1448 = vmatmul.mubr.bf16.gmra.mxu0 %v943
  %v1449 = vpop.f32.mrf.mxu0
  %v1450 = vadd.f32 %v1367, %v1449
  %v1451 = vpop.f32.mrf.mxu0
  %v1452 = vadd.f32 %v1369, %v1451
  %v1453 = vpop.f32.mrf.mxu0
  %v1454 = vadd.f32 %v1371, %v1453
  %v1455 = vpop.f32.mrf.mxu0
  %v1456 = vadd.f32 %v1373, %v1455
  %1457 = vmatprep.mubr.bf16.mxu0 %v1293
  %1458 = vmatmul.mubr.bf16.gmra.mxu0 %v947
  %v1459 = vpop.f32.mrf.mxu0
  %v1460 = vadd.f32 %v1377, %v1459
  %v1461 = vpop.f32.mrf.mxu0
  %v1462 = vadd.f32 %v1379, %v1461
  %v1463 = vpop.f32.mrf.mxu0
  %v1464 = vadd.f32 %v1381, %v1463
  %v1465 = vpop.f32.mrf.mxu0
  %v1466 = vadd.f32 %v1383, %v1465
  %1467 = vdwg.mxu0
  %v1468 = vmax.f32 %v1420, 0.0
  %v1469 = vmax.f32 %v1422, 0.0
  %v1470 = vmax.f32 %v1424, 0.0
  %v1471 = vmax.f32 %v1426, 0.0
  %v1472 = vmax.f32 %v1430, 0.0
  %v1473 = vmax.f32 %v1432, 0.0
  %v1474 = vmax.f32 %v1434, 0.0
  %v1475 = vmax.f32 %v1436, 0.0
  %v1476 = vmax.f32 %v1440, 0.0
  %v1477 = vmax.f32 %v1442, 0.0
  %v1478 = vmax.f32 %v1444, 0.0
  %v1479 = vmax.f32 %v1446, 0.0
  %v1480 = vmax.f32 %v1450, 0.0
  %v1481 = vmax.f32 %v1452, 0.0
  %v1482 = vmax.f32 %v1454, 0.0
  %v1483 = vmax.f32 %v1456, 0.0
  %v1484 = vmax.f32 %v1460, 0.0
  %v1485 = vmax.f32 %v1462, 0.0
  %v1486 = vmax.f32 %v1464, 0.0
  %v1487 = vmax.f32 %v1466, 0.0
  %v1488 = vmax.f32 %v1468, %v1470
  %v1489 = vmax.f32 %v1469, %v1471
  %1492 = vrot.lane.b32.xlu0 %v1488, 48
  %v1493 = vpop.permute.xlu0 %1492
  %1494 = vrot.lane.b32.xlu0 %v1489, 48
  %v1495 = vpop.permute.xlu0 %1494
  %vm1496 = vcmask 392192
  %v1497 = vsel %vm1496, %v1493, %v1495
  %v1499 = vmax.f32 %v1488, %v1497
  %v1500 = vmax.f32 %v1472, %v1474
  %v1501 = vmax.f32 %v1473, %v1475
  %1504 = vrot.lane.b32.xlu0 %v1500, 48
  %v1505 = vpop.permute.xlu0 %1504
  %1506 = vrot.lane.b32.xlu0 %v1501, 48
  %v1507 = vpop.permute.xlu0 %1506
  %v1508 = vsel %vm1496, %v1505, %v1507
  %v1510 = vmax.f32 %v1500, %v1508
  %v1511 = vmax.f32 %v1476, %v1478
  %v1512 = vmax.f32 %v1477, %v1479
  %1515 = vrot.lane.b32.xlu0 %v1511, 48
  %v1516 = vpop.permute.xlu0 %1515
  %1517 = vrot.lane.b32.xlu0 %v1512, 48
  %v1518 = vpop.permute.xlu0 %1517
  %v1519 = vsel %vm1496, %v1516, %v1518
  %v1521 = vmax.f32 %v1511, %v1519
  %v1522 = vmax.f32 %v1480, %v1482
  %v1523 = vmax.f32 %v1481, %v1483
  %1526 = vrot.lane.b32.xlu0 %v1522, 48
  %v1527 = vpop.permute.xlu0 %1526
  %1528 = vrot.lane.b32.xlu0 %v1523, 48
  %v1529 = vpop.permute.xlu0 %1528
  %v1530 = vsel %vm1496, %v1527, %v1529
  %v1532 = vmax.f32 %v1522, %v1530
  %v1533 = vmax.f32 %v1484, %v1486
  %v1534 = vmax.f32 %v1485, %v1487
  %1537 = vrot.lane.b32.xlu0 %v1533, 48
  %v1538 = vpop.permute.xlu0 %1537
  %1539 = vrot.lane.b32.xlu0 %v1534, 48
  %v1540 = vpop.permute.xlu0 %1539
  %v1541 = vsel %vm1496, %v1538, %v1540
  %v1543 = vmax.f32 %v1533, %v1541
  %1545 = vrot.lane.b32.xlu0 %v1510, 80
  %v1546 = vpop.permute.xlu0 %1545
  %1549 = vrot.lane.b32.xlu0 %v1521, 32
  %v1550 = vpop.permute.xlu0 %1549
  %1553 = vrot.lane.b32.xlu0 %v1532, 112
  %v1554 = vpop.permute.xlu0 %1553
  %1557 = vrot.lane.b32.xlu0 %v1543, 64
  %v1558 = vpop.permute.xlu0 %1557
  %v1560 = vsel %vm918, %v1499, %v1546
  %v1561 = vsel %vm325, %v1546, %v1550
  %vm1562 = vcmask 916480
  %v1563 = vsel %vm1562, %v1561, %v1554
  %vm1564 = vcmask 523264
  %v1565 = vsel %vm1564, %v1554, %v1558
  %v1566 = vpack.c.bf16 %v1560, %v1560
  %v1567 = vpack.c.bf16 %v1563, %v1563
  %v1568 = vpack.c.bf16 %v1565, %v1565
  %v1569 = vpack.c.bf16 %v1558, %v1558
  %v1570 = vld [vmem:[%s5] sm:$0xf]
  %v1571 = vld [vmem:[%s5 + $0x4] sm:$0xf]
  %v1572 = vld [vmem:[%s5 + $0x8] sm:$0xf]
  %v1573 = vld [vmem:[%s5 + $0xc] sm:$0xf]
  %v1574 = vld [vmem:[%s5 + $0x10] sm:$0xf]
  %v1575 = vld [vmem:[%s5 + $0x14] sm:$0xf]
  %v1576 = vld [vmem:[%s5 + $0x18] sm:$0xf]
  %v1577 = vld [vmem:[%s5 + $0x1c] sm:$0xf]
  %v1578 = vld [vmem:[%s5 + $0x20] sm:$0xf]
  %v1579 = vld [vmem:[%s5 + $0x24] sm:$0xf]
  %v1580 = vld [vmem:[%s5 + $0x28] sm:$0xf]
  %v1581 = vld [vmem:[%s5 + $0x2c] sm:$0xf]
  %v1582 = vld [vmem:[%s5 + $0x30] sm:$0xf]
  %v1583 = vld [vmem:[%s5 + $0x34] sm:$0xf]
  %v1584 = vld [vmem:[%s5 + $0x38] sm:$0xf]
  %v1585 = vld [vmem:[%s5 + $0x3c] sm:$0xf]
  %v1586 = vld [vmem:[%s5 + $0x40] sm:$0xf]
  %v1587 = vld [vmem:[%s5 + $0x44] sm:$0xf]
  %v1588 = vld [vmem:[%s5 + $0x48] sm:$0xf]
  %v1589 = vld [vmem:[%s5 + $0x4c] sm:$0xf]
  %v1590 = vld [vmem:[%s5 + $0x50] sm:$0xf]
  %v1591 = vld [vmem:[%s5 + $0x54] sm:$0xf]
  %v1592 = vld [vmem:[%s5 + $0x58] sm:$0xf]
  %v1593 = vld [vmem:[%s5 + $0x5c] sm:$0xf]
  %v1594 = vld [vmem:[%s5 + $0x60] sm:$0xf]
  %v1595 = vld [vmem:[%s5 + $0x64] sm:$0xf]
  %v1596 = vld [vmem:[%s5 + $0x68] sm:$0xf]
  %v1597 = vld [vmem:[%s5 + $0x6c] sm:$0xf]
  %v1598 = vld [vmem:[%s5 + $0x70] sm:$0xf]
  %v1599 = vld [vmem:[%s5 + $0x74] sm:$0xf]
  %v1600 = vld [vmem:[%s5 + $0x78] sm:$0xf]
  %v1601 = vld [vmem:[%s5 + $0x7c] sm:$0xf]
  %v1602 = vld [vmem:[%s5 + $0x80] sm:$0xf]
  %v1603 = vld [vmem:[%s5 + $0x84] sm:$0xf]
  %v1604 = vld [vmem:[%s5 + $0x88] sm:$0xf]
  %v1605 = vld [vmem:[%s5 + $0x8c] sm:$0xf]
  %v1606 = vld [vmem:[%s5 + $0x90] sm:$0xf]
  %v1607 = vld [vmem:[%s5 + $0x94] sm:$0xf]
  %v1608 = vld [vmem:[%s5 + $0x98] sm:$0xf]
  %v1609 = vld [vmem:[%s5 + $0x9c] sm:$0xf]
  %v1610 = vld [vmem:[%s5 + $0xa0] sm:$0xf]
  %v1611 = vld [vmem:[%s5 + $0xa4] sm:$0xf]
  %v1612 = vld [vmem:[%s5 + $0xa8] sm:$0xf]
  %v1613 = vld [vmem:[%s5 + $0xac] sm:$0xf]
  %v1614 = vld [vmem:[%s5 + $0xb0] sm:$0xf]
  %v1615 = vld [vmem:[%s5 + $0xb4] sm:$0xf]
  %v1616 = vld [vmem:[%s5 + $0xb8] sm:$0xf]
  %v1617 = vld [vmem:[%s5 + $0xbc] sm:$0xf]
  %v1618 = vld [vmem:[%s5 + $0xc0] sm:$0xf]
  %v1619 = vld [vmem:[%s5 + $0xc4] sm:$0xf]
  %v1620 = vld [vmem:[%s6] sm:$0x1]
  %v1622 = vlaneseq
  %v1623 = vshrl.u32 %v1622, 7
  %v1624 = vsub.s32 0, %v1623
  %v1625 = vrot.slane %v1620, %v1624
  %v1677 = vunpack.c.l.b16 %v1570
  %v1678 = vunpack.c.l.b16 %v1571
  %v1679 = vunpack.c.l.b16 %v1572
  %v1680 = vunpack.c.l.b16 %v1573
  %v1681 = vunpack.c.l.b16 %v1574
  %v1682 = vunpack.c.l.b16 %v1575
  %v1683 = vunpack.c.l.b16 %v1576
  %v1684 = vunpack.c.l.b16 %v1577
  %v1685 = vunpack.c.l.b16 %v1578
  %v1686 = vunpack.c.l.b16 %v1579
  %v1687 = vunpack.c.l.b16 %v1580
  %v1688 = vunpack.c.l.b16 %v1581
  %v1689 = vunpack.c.l.b16 %v1582
  %v1690 = vunpack.c.l.b16 %v1583
  %v1691 = vunpack.c.l.b16 %v1584
  %v1692 = vunpack.c.l.b16 %v1585
  %v1693 = vunpack.c.l.b16 %v1586
  %v1694 = vunpack.c.l.b16 %v1587
  %v1695 = vunpack.c.l.b16 %v1588
  %v1696 = vunpack.c.l.b16 %v1589
  %v1697 = vunpack.c.l.b16 %v1590
  %v1698 = vunpack.c.l.b16 %v1591
  %v1699 = vunpack.c.l.b16 %v1592
  %v1700 = vunpack.c.l.b16 %v1593
  %v1701 = vunpack.c.l.b16 %v1594
  %v1702 = vunpack.c.l.b16 %v1595
  %v1703 = vunpack.c.l.b16 %v1596
  %v1704 = vunpack.c.l.b16 %v1597
  %v1705 = vunpack.c.l.b16 %v1598
  %v1706 = vunpack.c.l.b16 %v1599
  %v1707 = vunpack.c.l.b16 %v1600
  %v1708 = vunpack.c.l.b16 %v1601
  %v1709 = vunpack.c.l.b16 %v1602
  %v1710 = vunpack.c.l.b16 %v1603
  %v1711 = vunpack.c.l.b16 %v1604
  %v1712 = vunpack.c.l.b16 %v1605
  %v1713 = vunpack.c.l.b16 %v1606
  %v1714 = vunpack.c.l.b16 %v1607
  %v1715 = vunpack.c.l.b16 %v1608
  %v1716 = vunpack.c.l.b16 %v1609
  %v1717 = vunpack.c.l.b16 %v1610
  %v1718 = vunpack.c.l.b16 %v1611
  %v1719 = vunpack.c.l.b16 %v1612
  %v1720 = vunpack.c.l.b16 %v1613
  %v1721 = vunpack.c.l.b16 %v1614
  %v1722 = vunpack.c.l.b16 %v1615
  %v1723 = vunpack.c.l.b16 %v1616
  %v1724 = vunpack.c.l.b16 %v1617
  %v1725 = vunpack.c.l.b16 %v1618
  %v1726 = vunpack.c.l.b16 %v1619
  %v1727 = vpack.c.b16 %v1678, %v1677
  %v1728 = vpack.c.b16 %v1680, %v1679
  %v1729 = vpack.c.b16 %v1682, %v1681
  %v1730 = vpack.c.b16 %v1684, %v1683
  %v1731 = vpack.c.b16 %v1686, %v1685
  %v1732 = vpack.c.b16 %v1688, %v1687
  %v1733 = vpack.c.b16 %v1690, %v1689
  %v1734 = vpack.c.b16 %v1692, %v1691
  %v1735 = vpack.c.b16 %v1694, %v1693
  %v1736 = vpack.c.b16 %v1696, %v1695
  %v1737 = vpack.c.b16 %v1698, %v1697
  %v1738 = vpack.c.b16 %v1700, %v1699
  %v1739 = vpack.c.b16 %v1702, %v1701
  %v1740 = vpack.c.b16 %v1704, %v1703
  %v1741 = vpack.c.b16 %v1706, %v1705
  %v1742 = vpack.c.b16 %v1708, %v1707
  %v1743 = vpack.c.b16 %v1710, %v1709
  %v1744 = vpack.c.b16 %v1712, %v1711
  %v1745 = vpack.c.b16 %v1714, %v1713
  %v1746 = vpack.c.b16 %v1716, %v1715
  %v1747 = vpack.c.b16 %v1718, %v1717
  %v1748 = vpack.c.b16 %v1720, %v1719
  %v1749 = vpack.c.b16 %v1722, %v1721
  %v1750 = vpack.c.b16 %v1724, %v1723
  %v1751 = vpack.c.b16 %v1726, %v1725
  %vm1777 = vcmask 130048
  %v1779 = vsel %vm1777, %v1569, 0
  %1781 = vmatprep.subr.bf16.mxu0 0
  %1782 = vmatpush1.bf16.msra.mxu0 %v1734
  %1783 = vmatprep.subr.bf16.mxu0 0
  %1784 = vmatpush1.bf16.msra.mxu0 %v1733
  %1785 = vmatprep.subr.bf16.mxu0 0
  %1786 = vmatpush1.bf16.msra.mxu0 %v1732
  %1787 = vmatprep.subr.bf16.mxu0 0
  %1788 = vmatpush1.bf16.msra.mxu0 %v1731
  %1789 = vmatprep.subr.bf16.mxu0 0
  %1790 = vmatpush1.bf16.msra.mxu0 %v1730
  %1791 = vmatprep.subr.bf16.mxu0 0
  %1792 = vmatpush1.bf16.msra.mxu0 %v1729
  %1793 = vmatprep.subr.bf16.mxu0 0
  %1794 = vmatpush1.bf16.msra.mxu0 %v1728
  %1795 = vmatprep.subr.bf16.mxu0 0
  %1796 = vmatpush1.bf16.msra.mxu0 %v1727
  %1797 = vmatprep.subr.bf16.mxu0 0
  %1798 = vmatpush2.bf16.msra.mxu0 %v1742
  %1799 = vmatprep.subr.bf16.mxu0 0
  %1800 = vmatpush2.bf16.msra.mxu0 %v1741
  %1801 = vmatprep.subr.bf16.mxu0 0
  %1802 = vmatpush2.bf16.msra.mxu0 %v1740
  %1803 = vmatprep.subr.bf16.mxu0 0
  %1804 = vmatpush2.bf16.msra.mxu0 %v1739
  %1805 = vmatprep.subr.bf16.mxu0 0
  %1806 = vmatpush2.bf16.msra.mxu0 %v1738
  %1807 = vmatprep.subr.bf16.mxu0 0
  %1808 = vmatpush2.bf16.msra.mxu0 %v1737
  %1809 = vmatprep.subr.bf16.mxu0 0
  %1810 = vmatpush2.bf16.msra.mxu0 %v1736
  %1811 = vmatprep.subr.bf16.mxu0 0
  %1812 = vmatpush2.bf16.msra.mxu0 %v1735
  %1813 = vmatprep.mubr.bf16.mxu0 %v1567
  %1814 = vmatmul.mubr.bf16.gmra.mxu0 %v1566
  %v1815 = vpop.f32.mrf.mxu0
  %v1816 = vadd.f32 %v1625, %v1815
  %v1817 = vpop.f32.mrf.mxu0
  %v1818 = vpop.f32.mrf.mxu0
  %v1819 = vpop.f32.mrf.mxu0
  %1820 = vdwg.mxu0
  %1821 = vmatprep.subr.bf16.mxu0 0
  %1822 = vmatpush1.bf16.msra.mxu0 %v1750
  %1823 = vmatprep.subr.bf16.mxu0 0
  %1824 = vmatpush1.bf16.msra.mxu0 %v1749
  %1825 = vmatprep.subr.bf16.mxu0 0
  %1826 = vmatpush1.bf16.msra.mxu0 %v1748
  %1827 = vmatprep.subr.bf16.mxu0 0
  %1828 = vmatpush1.bf16.msra.mxu0 %v1747
  %1829 = vmatprep.subr.bf16.mxu0 0
  %1830 = vmatpush1.bf16.msra.mxu0 %v1746
  %1831 = vmatprep.subr.bf16.mxu0 0
  %1832 = vmatpush1.bf16.msra.mxu0 %v1745
  %1833 = vmatprep.subr.bf16.mxu0 0
  %1834 = vmatpush1.bf16.msra.mxu0 %v1744
  %1835 = vmatprep.subr.bf16.mxu0 0
  %1836 = vmatpush1.bf16.msra.mxu0 %v1743
  %1837 = vmatprep.subr.bf16.mxu0 0
  %1838 = vmatpush2.bf16.msra.mxu0 0
  %1839 = vmatprep.subr.bf16.mxu0 0
  %1840 = vmatpush2.bf16.msra.mxu0 0
  %1841 = vmatprep.subr.bf16.mxu0 0
  %1842 = vmatpush2.bf16.msra.mxu0 0
  %1843 = vmatprep.subr.bf16.mxu0 0
  %1844 = vmatpush2.bf16.msra.mxu0 0
  %1845 = vmatprep.subr.bf16.mxu0 0
  %1846 = vmatpush2.bf16.msra.mxu0 0
  %1847 = vmatprep.subr.bf16.mxu0 0
  %1848 = vmatpush2.bf16.msra.mxu0 0
  %1849 = vmatprep.subr.bf16.mxu0 0
  %1850 = vmatpush2.bf16.msra.mxu0 0
  %1851 = vmatprep.subr.bf16.mxu0 0
  %1852 = vmatpush2.bf16.msra.mxu0 %v1751
  %1853 = vmatprep.mubr.bf16.mxu0 %v1779
  %1854 = vmatmul.mubr.bf16.gmra.mxu0 %v1568
  %v1855 = vpop.f32.mrf.mxu0
  %v1856 = vadd.f32 %v1816, %v1855
  %v1857 = vpop.f32.mrf.mxu0
  %v1858 = vpop.f32.mrf.mxu0
  %v1859 = vpop.f32.mrf.mxu0
  %1860 = vdwg.mxu0
  %v1861 = vmax.f32 %v1856, 0.0
  %v1862 = vpack.c.bf16 %v1861, %v1861
  %v1863 = vld [vmem:[%s7] sm:$0xf]
  %v1864 = vld [vmem:[%s7 + $0x4] sm:$0xf]
  %v1865 = vld [vmem:[%s7 + $0x8] sm:$0xf]
  %v1866 = vld [vmem:[%s7 + $0xc] sm:$0xf]
  %v1867 = vld [vmem:[%s7 + $0x10] sm:$0xf]
  %v1868 = vld [vmem:[%s7 + $0x14] sm:$0xf]
  %v1869 = vld [vmem:[%s7 + $0x18] sm:$0xf]
  %v1870 = vld [vmem:[%s7 + $0x1c] sm:$0xf]
  %v1871 = vld [vmem:[%s7 + $0x20] sm:$0xf]
  %v1872 = vld [vmem:[%s7 + $0x24] sm:$0xf]
  %v1873 = vld [vmem:[%s7 + $0x28] sm:$0xf]
  %v1874 = vld [vmem:[%s7 + $0x2c] sm:$0xf]
  %v1875 = vld [vmem:[%s7 + $0x30] sm:$0xf]
  %v1876 = vld [vmem:[%s7 + $0x34] sm:$0xf]
  %v1877 = vld [vmem:[%s7 + $0x38] sm:$0xf]
  %v1878 = vld [vmem:[%s8] sm:$0x1]
  %v1880 = vlaneseq
  %v1881 = vshrl.u32 %v1880, 7
  %v1882 = vsub.s32 0, %v1881
  %v1883 = vrot.slane %v1878, %v1882
  %v1900 = vunpack.c.l.b16 %v1863
  %v1901 = vunpack.c.l.b16 %v1864
  %v1902 = vunpack.c.l.b16 %v1865
  %v1903 = vunpack.c.l.b16 %v1866
  %v1904 = vunpack.c.l.b16 %v1867
  %v1905 = vunpack.c.l.b16 %v1868
  %v1906 = vunpack.c.l.b16 %v1869
  %v1907 = vunpack.c.l.b16 %v1870
  %v1908 = vunpack.c.l.b16 %v1871
  %v1909 = vunpack.c.l.b16 %v1872
  %v1910 = vunpack.c.l.b16 %v1873
  %v1911 = vunpack.c.l.b16 %v1874
  %v1912 = vunpack.c.l.b16 %v1875
  %v1913 = vunpack.c.l.b16 %v1876
  %v1914 = vunpack.c.l.b16 %v1877
  %v1915 = vpack.c.b16 %v1901, %v1900
  %v1916 = vpack.c.b16 %v1903, %v1902
  %v1917 = vpack.c.b16 %v1905, %v1904
  %v1918 = vpack.c.b16 %v1907, %v1906
  %v1919 = vpack.c.b16 %v1909, %v1908
  %v1920 = vpack.c.b16 %v1911, %v1910
  %v1921 = vpack.c.b16 %v1913, %v1912
  %v1922 = vpack.c.b16 %v1914, %v1914
  %vm1930 = vcmask 982016
  %v1932 = vsel %vm1930, %v1862, 0
  %vm1934 = vcmask 1043456
  %v1936 = vsel %vm1934, %v1922, 0
  %1938 = vmatprep.subr.bf16.mxu0 0
  %1939 = vmatpush1.bf16.msra.mxu0 %v1936
  %1940 = vmatprep.subr.bf16.mxu0 0
  %1941 = vmatpush1.bf16.msra.mxu0 %v1921
  %1942 = vmatprep.subr.bf16.mxu0 0
  %1943 = vmatpush1.bf16.msra.mxu0 %v1920
  %1944 = vmatprep.subr.bf16.mxu0 0
  %1945 = vmatpush1.bf16.msra.mxu0 %v1919
  %1946 = vmatprep.subr.bf16.mxu0 0
  %1947 = vmatpush1.bf16.msra.mxu0 %v1918
  %1948 = vmatprep.subr.bf16.mxu0 0
  %1949 = vmatpush1.bf16.msra.mxu0 %v1917
  %1950 = vmatprep.subr.bf16.mxu0 0
  %1951 = vmatpush1.bf16.msra.mxu0 %v1916
  %1952 = vmatprep.subr.bf16.mxu0 0
  %1953 = vmatpush1.bf16.msra.mxu0 %v1915
  %1954 = vmatprep.subr.bf16.mxu0 0
  %1955 = vmatpush2.bf16.msra.mxu0 0
  %1956 = vmatprep.subr.bf16.mxu0 0
  %1957 = vmatpush2.bf16.msra.mxu0 0
  %1958 = vmatprep.subr.bf16.mxu0 0
  %1959 = vmatpush2.bf16.msra.mxu0 0
  %1960 = vmatprep.subr.bf16.mxu0 0
  %1961 = vmatpush2.bf16.msra.mxu0 0
  %1962 = vmatprep.subr.bf16.mxu0 0
  %1963 = vmatpush2.bf16.msra.mxu0 0
  %1964 = vmatprep.subr.bf16.mxu0 0
  %1965 = vmatpush2.bf16.msra.mxu0 0
  %1966 = vmatprep.subr.bf16.mxu0 0
  %1967 = vmatpush2.bf16.msra.mxu0 0
  %1968 = vmatprep.subr.bf16.mxu0 0
  %1969 = vmatpush2.bf16.msra.mxu0 0
  %1970 = vmatprep.mubr.bf16.mxu0 0
  %1971 = vmatmul.mubr.bf16.gmra.mxu0 %v1932
  %v1972 = vpop.f32.mrf.mxu0
  %v1973 = vadd.f32 %v1883, %v1972
  %v1974 = vpop.f32.mrf.mxu0
  %v1975 = vpop.f32.mrf.mxu0
  %v1976 = vpop.f32.mrf.mxu0
  %1977 = vdwg.mxu0
  %v1978 = vmax.f32 %v1973, 0.0
  %v1979 = vpack.c.bf16 %v1978, %v1978
  %v1980 = vld [vmem:[%s9] sm:$0xf]
  %v1981 = vld [vmem:[%s9 + $0x4] sm:$0xf]
  %v1982 = vld [vmem:[%s9 + $0x8] sm:$0xf]
  %v1983 = vld [vmem:[%s9 + $0xc] sm:$0xf]
  %v1984 = vld [vmem:[%s9 + $0x10] sm:$0xf]
  %v1985 = vld [vmem:[%s9 + $0x14] sm:$0xf]
  %v1986 = vld [vmem:[%s9 + $0x18] sm:$0xf]
  %v1987 = vld [vmem:[%s9 + $0x1c] sm:$0xf]
  %v1988 = vld [vmem:[%s9 + $0x20] sm:$0xf]
  %v1989 = vld [vmem:[%s9 + $0x24] sm:$0xf]
  %v1990 = vld [vmem:[%s9 + $0x28] sm:$0x3]
  %v1991 = vld [vmem:[%s10] sm:$0x1]
  %v1993 = vlaneseq
  %v1994 = vshrl.u32 %v1993, 7
  %v1995 = vsub.s32 0, %v1994
  %v1996 = vrot.slane %v1991, %v1995
  %v2009 = vunpack.c.l.b16 %v1980
  %v2010 = vunpack.c.l.b16 %v1981
  %v2011 = vunpack.c.l.b16 %v1982
  %v2012 = vunpack.c.l.b16 %v1983
  %v2013 = vunpack.c.l.b16 %v1984
  %v2014 = vunpack.c.l.b16 %v1985
  %v2015 = vunpack.c.l.b16 %v1986
  %v2016 = vunpack.c.l.b16 %v1987
  %v2017 = vunpack.c.l.b16 %v1988
  %v2018 = vunpack.c.l.b16 %v1989
  %v2019 = vunpack.c.l.b16 %v1990
  %v2020 = vpack.c.b16 %v2010, %v2009
  %v2021 = vpack.c.b16 %v2012, %v2011
  %v2022 = vpack.c.b16 %v2014, %v2013
  %v2023 = vpack.c.b16 %v2016, %v2015
  %v2024 = vpack.c.b16 %v2018, %v2017
  %v2025 = vpack.c.b16 %v2019, %v2019
  %v2032 = vsel %vm885, %v1979, 0
  %v2035 = vsel %vm1295, %v2025, 0
  %2037 = vmatprep.subr.bf16.mxu0 0
  %2038 = vmatpush1.bf16.msra.mxu0 0
  %2039 = vmatprep.subr.bf16.mxu0 0
  %2040 = vmatpush1.bf16.msra.mxu0 0
  %2041 = vmatprep.subr.bf16.mxu0 0
  %2042 = vmatpush1.bf16.msra.mxu0 %v2035
  %2043 = vmatprep.subr.bf16.mxu0 0
  %2044 = vmatpush1.bf16.msra.mxu0 %v2024
  %2045 = vmatprep.subr.bf16.mxu0 0
  %2046 = vmatpush1.bf16.msra.mxu0 %v2023
  %2047 = vmatprep.subr.bf16.mxu0 0
  %2048 = vmatpush1.bf16.msra.mxu0 %v2022
  %2049 = vmatprep.subr.bf16.mxu0 0
  %2050 = vmatpush1.bf16.msra.mxu0 %v2021
  %2051 = vmatprep.subr.bf16.mxu0 0
  %2052 = vmatpush1.bf16.msra.mxu0 %v2020
  %2053 = vmatprep.subr.bf16.mxu0 0
  %2054 = vmatpush2.bf16.msra.mxu0 0
  %2055 = vmatprep.subr.bf16.mxu0 0
  %2056 = vmatpush2.bf16.msra.mxu0 0
  %2057 = vmatprep.subr.bf16.mxu0 0
  %2058 = vmatpush2.bf16.msra.mxu0 0
  %2059 = vmatprep.subr.bf16.mxu0 0
  %2060 = vmatpush2.bf16.msra.mxu0 0
  %2061 = vmatprep.subr.bf16.mxu0 0
  %2062 = vmatpush2.bf16.msra.mxu0 0
  %2063 = vmatprep.subr.bf16.mxu0 0
  %2064 = vmatpush2.bf16.msra.mxu0 0
  %2065 = vmatprep.subr.bf16.mxu0 0
  %2066 = vmatpush2.bf16.msra.mxu0 0
  %2067 = vmatprep.subr.bf16.mxu0 0
  %2068 = vmatpush2.bf16.msra.mxu0 0
  %2069 = vmatprep.mubr.bf16.mxu0 0
  %2070 = vmatmul.mubr.bf16.gmra.mxu0 %v2032
  %v2071 = vpop.f32.mrf.mxu0
  %v2072 = vadd.f32 %v1996, %v2071
  %v2073 = vpop.f32.mrf.mxu0
  %v2074 = vpop.f32.mrf.mxu0
  %v2075 = vpop.f32.mrf.mxu0
  %2076 = vdwg.mxu0
  %2077 = vst [vmem:[%s11] sm:$0xff] %v2072
  // Predicated region
  $region46: #{lenet5_forward.1} parent=0 // pred_check
    _
  $region47: #{lenet5_forward.1} parent=0 // pred_check_branch
    %2079 = sbr.rel (0) target = $region49
  $region48: #{lenet5_forward.1} parent=0 // pred_region
    _
  $region49: #{lenet5_forward.1} parent=0 // pred_fallthru
    _
  // Predicated region
  $region50: #{lenet5_forward.1} parent=0 // pred_check
    _
  $region51: #{lenet5_forward.1} parent=0 // pred_check_branch
    %2081 = sbr.rel (0) target = $region53
  $region52: #{lenet5_forward.1} parent=0 // pred_region
    _
  $region53: #{lenet5_forward.1} parent=0 // pred_fallthru
    _

</llo_original>
